<compile_context>
chip_gen: v7x
topology: tpu7x:2x2x1
jax: 0.10.0
libtpu: 0.0.40
codegen_flags: <defaults>
</compile_context>

<pallas_src>
import functools

import numpy as np
import jax
import jax.numpy as jnp
from jax import lax
from jax.experimental import pallas as pl
from jax.experimental.pallas import tpu as pltpu


def _round_up(x, m):
    return (x + m - 1) // m * m


def _vmem_limit(usage_bytes):
    # Generous headroom over computed residency, clamped so the limit stays
    # legal on every chip (v7x physical VMEM is 64 MiB; v5e/v6e 128 MiB).
    return int(min(max(usage_bytes * 3 // 2 + (4 << 20), 32 << 20), 60 << 20))


# ----------------------------------------------------------------------------
# Fused multi-layer LSTM kernel (time-chunked grid, carried h/c state)
# ----------------------------------------------------------------------------
def _lstm_stack_kernel(*refs, num_layers, Tc, Bp, H, unroll):
    """One time-chunk of the fused multi-layer LSTM.

    refs layout:
      refs[0]                x_ref      (Tc*Bp, E)    layer-0 input chunk
      refs[1+3l .. 3+3l]     wih (Din,4H), whh (H,4H), bias (1,4H)   per layer
      refs[1+3L]             y_ref      (Tc*Bp, H)    last-layer output chunk
      refs[2+3L]             xproj_scr  (Tc*Bp, 4H)   hoisted input projection
      refs[3+3L]             act_scr    (Tc*Bp, H)    inter-layer activations
      refs[4+3L]             h_scr      (L, Bp, H)    carried hidden state
      refs[5+3L]             c_scr      (L, Bp, H)    carried cell state
    """
    x_ref = refs[0]
    y_ref = refs[1 + 3 * num_layers]
    xproj = refs[2 + 3 * num_layers]
    act = refs[3 + 3 * num_layers]
    h_scr = refs[4 + 3 * num_layers]
    c_scr = refs[5 + 3 * num_layers]

    # Zero initial state only on the first time chunk; later chunks continue
    # from the carried h/c scratch (grid axis is "arbitrary" -> sequential).
    @pl.when(pl.program_id(0) == 0)
    def _():
        h_scr[...] = jnp.zeros_like(h_scr)
        c_scr[...] = jnp.zeros_like(c_scr)

    cur = x_ref
    for layer in range(num_layers):
        wih = refs[1 + 3 * layer]
        whh = refs[2 + 3 * layer]
        bias = refs[3 + 3 * layer]

        # Hoisted input projection: one MXU matmul over the whole chunk
        # (no per-step x@W_ih, no per-step bias broadcast).
        # TODO(synk): optionally cast cur/wih to bf16 here for v6e/v7x MXU.
        xproj[...] = (
            jnp.dot(cur[...], wih[...], preferred_element_type=jnp.float32)
            + bias[...]
        )

        out = y_ref if layer == num_layers - 1 else act
        whh_v = whh[...]  # hoisted: loop-invariant recurrent weights

        def step(t, carry, out=out, whh_v=whh_v):
            h, c = carry
            r0 = pl.multiple_of(t * Bp, Bp)          # sublane-aligned slab
            gates = xproj[pl.ds(r0, Bp), :] + jnp.dot(
                h, whh_v, preferred_element_type=jnp.float32)
            # Gate order permuted at param-prep to (i, f, o, g):
            # sigmoid over the contiguous [:3H] slab, tanh only on [3H:].
            sio = jax.nn.sigmoid(gates[:, :3 * H])
            g = jnp.tanh(gates[:, 3 * H:])
            i = sio[:, 0 * H:1 * H]
            f = sio[:, 1 * H:2 * H]
            o = sio[:, 2 * H:3 * H]
            c_new = f * c + i * g
            h_new = o * jnp.tanh(c_new)
            out[pl.ds(r0, Bp), :] = h_new            # only store: y[t]
            return (h_new, c_new)

        h_fin, c_fin = lax.fori_loop(
            0, Tc, step, (h_scr[layer], c_scr[layer]), unroll=unroll)
        h_scr[layer] = h_fin
        c_scr[layer] = c_fin
        cur = out


def _lstm_vmem_usage(Tc, Bp, H, L, dins):
    """Approximate VMEM residency (bytes, f32) for one time-chunk step."""
    chunk = (2 * Tc * Bp * dins[0]       # x block (double-buffered)
             + 2 * Tc * Bp * H           # y block (double-buffered)
             + Tc * Bp * 4 * H           # xproj scratch
             + Tc * Bp * H)              # inter-layer act scratch
    weights = 2 * sum(d * 4 * H + H * 4 * H + 4 * H for d in dins)
    state = 2 * L * Bp * H
    return (chunk + weights + state) * 4


def lstm_stack(x_flat, lstm_params, T, Bp, *, max_chunk_t=None, unroll=None,
               vmem_budget=28 << 20):
    """x_flat: (T*Bp, E) time-major flattened input -> (T*Bp, H) last-layer h."""
    H = lstm_params[0][1].shape[0]
    E = lstm_params[0][0].shape[0]
    L = len(lstm_params)
    dins = [w[0].shape[0] for w in lstm_params]

    # Time-chunk size: largest divisor of T (capped) whose residency fits the
    # conservative budget -- keeps VMEM O(chunk), chip-agnostic safe.
    cap = T if max_chunk_t is None else max(1, min(T, max_chunk_t))
    Tc = 1
    for tc in range(1, T + 1):
        if (T % tc == 0 and tc <= cap
                and _lstm_vmem_usage(tc, Bp, H, L, dins) <= vmem_budget):
            Tc = tc
    n_chunks = T // Tc
    if unroll is None:
        unroll = Tc if Tc <= 16 else 4   # fully unroll short chunks

    flat_w = [w for layer_ws in lstm_params for w in layer_ws]
    kernel = functools.partial(
        _lstm_stack_kernel, num_layers=L, Tc=Tc, Bp=Bp, H=H, unroll=unroll)

    def full_spec(shape):
        return pl.BlockSpec(shape, lambda i: (0,) * len(shape))

    w_specs = []
    for (wih, whh, bias) in lstm_params:
        w_specs += [full_spec(wih.shape), full_spec(whh.shape),
                    full_spec(bias.shape)]

    usage = _lstm_vmem_usage(Tc, Bp, H, L, dins)
    return pl.pallas_call(
        kernel,
        out_shape=jax.ShapeDtypeStruct((T * Bp, H), jnp.float32),
        grid_spec=pltpu.PrefetchScalarGridSpec(
            num_scalar_prefetch=0,
            grid=(n_chunks,),
            in_specs=[pl.BlockSpec((Tc * Bp, E), lambda i: (i, 0))] + w_specs,
            out_specs=pl.BlockSpec((Tc * Bp, H), lambda i: (i, 0)),
            scratch_shapes=[
                pltpu.VMEM((Tc * Bp, 4 * H), jnp.float32),  # hoisted projection
                pltpu.VMEM((Tc * Bp, H), jnp.float32),      # inter-layer ping-pong
                pltpu.VMEM((L, Bp, H), jnp.float32),        # carried h per layer
                pltpu.VMEM((L, Bp, H), jnp.float32),        # carried c per layer
            ]),
        compiler_params=pltpu.CompilerParams(
            dimension_semantics=("arbitrary",),
            vmem_limit_bytes=_vmem_limit(usage)),
    )(x_flat, *flat_w)


# ----------------------------------------------------------------------------
# Tiled vocab projection
# ----------------------------------------------------------------------------
def _linear_kernel(h_ref, w_ref, b_ref, o_ref):
    o_ref[...] = (
        jnp.dot(h_ref[...], w_ref[...], preferred_element_type=jnp.float32)
        + b_ref[...]
    )


def _choose_linear_tiles(N, H, Vp, budget=48 << 20):
    tile_v = 128
    for t in (512, 256):
        if Vp % t == 0:
            tile_v = t
            break
    tile_n = min(512, _round_up(N, 8))

    def usage(tn, tv):
        # double-buffered h/w/b blocks + output block
        return 2 * (tn * H + H * tv + tv + tn * tv) * 4

    while usage(tile_n, tile_v) > budget and (tile_n > 8 or tile_v > 128):
        if tile_n >= tile_v and tile_n > 8:
            tile_n = max(8, tile_n // 2)
        elif tile_v > 128:
            tile_v //= 2
        else:
            tile_n = max(8, tile_n // 2)
    return tile_n, tile_v, usage(tile_n, tile_v)


def linear(h, w_t, b):
    """Tiled h @ w_t + b with lane-dense (128-multiple) output tiles."""
    N, H = h.shape
    V = w_t.shape[1]
    Vp = _round_up(V, 128)                       # pad vocab -> lane-dense tiles
    if Vp != V:
        w_t = jnp.pad(w_t, ((0, 0), (0, Vp - V)))
        b = jnp.pad(b, ((0, 0), (0, Vp - V)))

    tile_n, tile_v, usage = _choose_linear_tiles(N, H, Vp)
    Np = _round_up(N, tile_n)
    h_p = jnp.pad(h, ((0, Np - N), (0, 0))) if Np != N else h

    out = pl.pallas_call(
        _linear_kernel,
        out_shape=jax.ShapeDtypeStruct((Np, Vp), jnp.float32),
        grid=(Np // tile_n, Vp // tile_v),
        in_specs=[
            pl.BlockSpec((tile_n, H), lambda i, j: (i, 0)),
            pl.BlockSpec((H, tile_v), lambda i, j: (0, j)),
            pl.BlockSpec((1, tile_v), lambda i, j: (0, j)),
        ],
        out_specs=pl.BlockSpec((tile_n, tile_v), lambda i, j: (i, j)),
        compiler_params=pltpu.CompilerParams(
            dimension_semantics=("parallel", "parallel"),
            vmem_limit_bytes=_vmem_limit(usage)),
    )(h_p, w_t, b)
    return out[:N, :V]


# ----------------------------------------------------------------------------
# Parameter prep: permute PyTorch gate order (i,f,g,o) -> kernel order (i,f,o,g)
# ----------------------------------------------------------------------------
def _permute_gate_cols(m4h, H):
    return jnp.concatenate(
        [m4h[..., 0:2 * H], m4h[..., 3 * H:4 * H], m4h[..., 2 * H:3 * H]],
        axis=-1)


def prepare_params_for_kernel(params):
    """One-time prep so sigmoid covers a contiguous [:3H] slab and tanh the
    trailing [3H:] slab inside the kernel.  Must permute W_ih, W_hh and bias
    consistently (done here)."""
    H = params["lstm"][0][1].shape[0]
    prepped = dict(params)
    prepped["lstm"] = [
        (_permute_gate_cols(wih, H), _permute_gate_cols(whh, H),
         _permute_gate_cols(bias, H))
        for (wih, whh, bias) in params["lstm"]
    ]
    return prepped


# ----------------------------------------------------------------------------
# Full forward (wrapper / glue)
# ----------------------------------------------------------------------------
def lstm_model_forward(params, input_features, capts, lens, *, max_chunk_t=None):
    """Pallas implementation of LSTMModel.forward.

    params must be kernel-layout (see prepare_params_for_kernel).
    input_features: (B, E) float32
    capts:          (B, T-1) int32 token ids
    lens:           python list[int], sorted descending, lens[0] == T
    returns:        (sum(lens), V) float32  -- same as torch packed output
    """
    B, E = input_features.shape
    T = capts.shape[1] + 1

    # Embedding lookup + concat of the image feature (pure gather, XLA glue).
    emb = jnp.take(params["embedding"], capts, axis=0)            # (B, T-1, E)
    seq = jnp.concatenate([input_features[:, None, :], emb], 1)   # (B, T, E)

    # Time-major, batch padded to a sublane multiple (>=8), flattened so each
    # timestep is an aligned Bp-row slab and the hoisted input projection is
    # one big matmul per chunk.
    Bp = _round_up(max(B, 8), 8)
    x = jnp.transpose(seq, (1, 0, 2)).astype(jnp.float32)         # (T, B, E)
    if Bp != B:
        x = jnp.pad(x, ((0, 0), (0, Bp - B), (0, 0)))
    x = x.reshape(T * Bp, E)

    y = lstm_stack(x, params["lstm"], T, Bp, max_chunk_t=max_chunk_t)

    # pack_padded_sequence ordering: time-major over valid (t, b) entries.
    packed_idx = np.array(
        [t * Bp + b for t in range(T) for b in range(B) if lens[b] > t],
        dtype=np.int32,
    )
    packed_h = y[packed_idx]                                      # (sum(lens), H)
    # TODO(synk): fuse this packed-order gather into linear() via
    # PrefetchScalarGridSpec + per-row index_map to drop one HBM round trip.

    return linear(packed_h, params["linear_w_t"], params["linear_b"])


# ----------------------------------------------------------------------------
# Pure-JAX reference (sanity check; consumes PyTorch-layout params)
# ----------------------------------------------------------------------------
def reference_forward(params, input_features, capts, lens):
    B, E = input_features.shape
    T = capts.shape[1] + 1
    emb = jnp.take(params["embedding"], capts, axis=0)
    seq = jnp.concatenate([input_features[:, None, :], emb], 1)   # (B, T, E)
    x = seq
    for (w_ih_t, w_hh_t, bias) in params["lstm"]:
        H = w_hh_t.shape[0]
        h = jnp.zeros((B, H), jnp.float32)
        c = jnp.zeros((B, H), jnp.float32)
        outs = []
        for t in range(T):
            gates = x[:, t] @ w_ih_t + h @ w_hh_t + bias
            i = jax.nn.sigmoid(gates[:, 0 * H:1 * H])
            f = jax.nn.sigmoid(gates[:, 1 * H:2 * H])
            g = jnp.tanh(gates[:, 2 * H:3 * H])
            o = jax.nn.sigmoid(gates[:, 3 * H:4 * H])
            c = f * c + i * g
            h = o * jnp.tanh(c)
            outs.append(h)
        x = jnp.stack(outs, axis=1)                               # (B, T, H)
    packed = jnp.concatenate(
        [x[b, t][None] for t in range(T) for b in range(B) if lens[b] > t], 0
    )
    return packed @ params["linear_w_t"] + params["linear_b"]


# ----------------------------------------------------------------------------
# Deterministic parameter init (synthetic, PyTorch-like shapes / gate order)
# ----------------------------------------------------------------------------
def init_params(key, vocab, E, H, num_layers):
    keys = jax.random.split(key, 2 + 4 * num_layers)
    k_emb, k_lin = keys[0], keys[1]
    params = {}
    params["embedding"] = jax.random.normal(k_emb, (vocab, E), jnp.float32)

    bound = 1.0 / np.sqrt(H)
    lstm_params = []
    for layer in range(num_layers):
        din = E if layer == 0 else H
        k1, k2, k3, k4 = keys[2 + 4 * layer: 2 + 4 * (layer + 1)]
        w_ih = jax.random.uniform(k1, (4 * H, din), jnp.float32, -bound, bound)
        w_hh = jax.random.uniform(k2, (4 * H, H), jnp.float32, -bound, bound)
        b_ih = jax.random.uniform(k3, (4 * H,), jnp.float32, -bound, bound)
        b_hh = jax.random.uniform(k4, (4 * H,), jnp.float32, -bound, bound)
        # Store transposed for (x @ W) form; combine biases. PyTorch gate order.
        lstm_params.append((w_ih.T, w_hh.T, (b_ih + b_hh).reshape(1, 4 * H)))
    params["lstm"] = lstm_params

    kb1, kb2 = jax.random.split(k_lin)
    lin_bound = 1.0 / np.sqrt(H)
    w = jax.random.uniform(kb1, (vocab, H), jnp.float32, -lin_bound, lin_bound)
    b = jax.random.uniform(kb2, (vocab,), jnp.float32, -lin_bound, lin_bound)
    params["linear_w_t"] = w.T                 # (H, V)
    params["linear_b"] = b.reshape(1, vocab)   # (1, V)
    return params


# ----------------------------------------------------------------------------
if __name__ == "__main__":
    key = jax.random.PRNGKey(0)

    def run_case(case_key, *, E, H, vocab, L, B, cap_len, lens,
                 max_chunk_t=None):
        T = cap_len + 1
        assert lens[0] == T and all(lens[i] >= lens[i + 1]
                                    for i in range(len(lens) - 1))
        k_p, k_f, k_c = jax.random.split(case_key, 3)
        params = init_params(k_p, vocab, E, H, L)
        feats = jax.random.normal(k_f, (B, E), jnp.float32)
        capts = jax.random.randint(k_c, (B, cap_len), 0, vocab, jnp.int32)

        kparams = prepare_params_for_kernel(params)
        out = jax.block_until_ready(
            lstm_model_forward(kparams, feats, capts, lens,
                               max_chunk_t=max_chunk_t))
        ref = jax.block_until_ready(
            reference_forward(params, feats, capts, lens))
        assert out.shape == (sum(lens), vocab), out.shape
        np.testing.assert_allclose(np.asarray(out), np.asarray(ref),
                                   rtol=1e-4, atol=1e-4)

    k1, k2 = jax.random.split(key)
    # Case 1: module-consistent small shapes, single time chunk.
    run_case(k1, E=32, H=32, vocab=256, L=2, B=2, cap_len=7, lens=[8, 6])
    # Case 2: non-128-multiple vocab (exercises V padding) + forced multi-chunk
    # recurrence (exercises the carried-h/c grid path across time chunks).
    run_case(k2, E=32, H=32, vocab=200, L=2, B=3, cap_len=11,
             lens=[12, 9, 5], max_chunk_t=4)

    print("KERNEL_OK")
</pallas_src>

<mosaic_0001>
module attributes {stable_mosaic.version = 11 : i64} {
  func.func @_lstm_stack_kernel(%arg0: i32, %arg1: memref<64x32xf32, #tpu.memory_space<vmem>>, %arg2: memref<32x128xf32, #tpu.memory_space<vmem>>, %arg3: memref<32x128xf32, #tpu.memory_space<vmem>>, %arg4: memref<1x128xf32, #tpu.memory_space<vmem>>, %arg5: memref<32x128xf32, #tpu.memory_space<vmem>>, %arg6: memref<32x128xf32, #tpu.memory_space<vmem>>, %arg7: memref<1x128xf32, #tpu.memory_space<vmem>>, %arg8: memref<64x32xf32, #tpu.memory_space<vmem>>, %arg9: memref<64x128xf32, #tpu.memory_space<vmem>>, %arg10: memref<64x32xf32, #tpu.memory_space<vmem>>, %arg11: memref<2x8x32xf32, #tpu.memory_space<vmem>>, %arg12: memref<2x8x32xf32, #tpu.memory_space<vmem>>) attributes {dimension_semantics = [#tpu.dimension_semantics<arbitrary>], iteration_bounds = array<i64: 1>, scalar_prefetch = 0 : i64, scratch_operands = 4 : i64, tpu.core_type = #tpu.core_type<tc>, window_params = [{transform_indices = @transform_0, window_bounds = array<i64: 64, 32>}, {pipeline_mode = #tpu.pipeline_mode<synchronous>, transform_indices = @transform_1, window_bounds = array<i64: 32, 128>}, {pipeline_mode = #tpu.pipeline_mode<synchronous>, transform_indices = @transform_2, window_bounds = array<i64: 32, 128>}, {pipeline_mode = #tpu.pipeline_mode<synchronous>, transform_indices = @transform_3, window_bounds = array<i64: 1, 128>}, {pipeline_mode = #tpu.pipeline_mode<synchronous>, transform_indices = @transform_4, window_bounds = array<i64: 32, 128>}, {pipeline_mode = #tpu.pipeline_mode<synchronous>, transform_indices = @transform_5, window_bounds = array<i64: 32, 128>}, {pipeline_mode = #tpu.pipeline_mode<synchronous>, transform_indices = @transform_6, window_bounds = array<i64: 1, 128>}, {transform_indices = @transform_7, window_bounds = array<i64: 64, 32>}]} {
    %c0_i32 = arith.constant 0 : i32
    %0 = arith.cmpi eq, %arg0, %c0_i32 : i32
    %1 = arith.extui %0 : i1 to i32
    %c0_i32_0 = arith.constant 0 : i32
    %2 = arith.cmpi ne, %1, %c0_i32_0 : i32
    scf.if %2 {
      %cst_134 = arith.constant 0.000000e+00 : f32
      %423 = vector.broadcast %cst_134 : f32 to vector<2x8x32xf32>
      %c0_135 = arith.constant 0 : index
      %c0_136 = arith.constant 0 : index
      %c0_137 = arith.constant 0 : index
      %424 = vector.load %arg11[%c0_135, %c0_136, %c0_137] : memref<2x8x32xf32, #tpu.memory_space<vmem>>, vector<2x8x32xf32>
      tpu.vector_store %arg11[%c0_135, %c0_136, %c0_137], %423 {strides = array<i32>} : memref<2x8x32xf32, #tpu.memory_space<vmem>>, vector<2x8x32xf32>,
      %cst_138 = arith.constant 0.000000e+00 : f32
      %425 = vector.broadcast %cst_138 : f32 to vector<2x8x32xf32>
      %c0_139 = arith.constant 0 : index
      %c0_140 = arith.constant 0 : index
      %c0_141 = arith.constant 0 : index
      %426 = vector.load %arg12[%c0_139, %c0_140, %c0_141] : memref<2x8x32xf32, #tpu.memory_space<vmem>>, vector<2x8x32xf32>
      tpu.vector_store %arg12[%c0_139, %c0_140, %c0_141], %425 {strides = array<i32>} : memref<2x8x32xf32, #tpu.memory_space<vmem>>, vector<2x8x32xf32>,
    } else {
    }
    %c0 = arith.constant 0 : index
    %c0_1 = arith.constant 0 : index
    %3 = vector.load %arg1[%c0, %c0_1] : memref<64x32xf32, #tpu.memory_space<vmem>>, vector<64x32xf32>
    %c0_2 = arith.constant 0 : index
    %c0_3 = arith.constant 0 : index
    %4 = vector.load %arg2[%c0_2, %c0_3] : memref<32x128xf32, #tpu.memory_space<vmem>>, vector<32x128xf32>
    %cst = arith.constant dense<0.000000e+00> : vector<64x128xf32>
    %5 = tpu.matmul %3, %4, %cst {dimension_numbers = #tpu.dot_dimension_numbers<[1], [0], [0], [1], [0, 0, 1, 1], [], []>} : vector<64x32xf32>, vector<32x128xf32>, vector<64x128xf32> -> vector<64x128xf32>
    %c0_4 = arith.constant 0 : index
    %c0_5 = arith.constant 0 : index
    %6 = vector.load %arg4[%c0_4, %c0_5] : memref<1x128xf32, #tpu.memory_space<vmem>>, vector<1x128xf32>
    %7 = vector.broadcast %6 : vector<1x128xf32> to vector<64x128xf32>
    %8 = arith.addf %5, %7 : vector<64x128xf32>
    %c0_6 = arith.constant 0 : index
    %c0_7 = arith.constant 0 : index
    %9 = vector.load %arg9[%c0_6, %c0_7] : memref<64x128xf32, #tpu.memory_space<vmem>>, vector<64x128xf32>
    tpu.vector_store %arg9[%c0_6, %c0_7], %8 {strides = array<i32>} : memref<64x128xf32, #tpu.memory_space<vmem>>, vector<64x128xf32>,
    %c0_8 = arith.constant 0 : index
    %c0_9 = arith.constant 0 : index
    %10 = vector.load %arg3[%c0_8, %c0_9] : memref<32x128xf32, #tpu.memory_space<vmem>>, vector<32x128xf32>
    %c0_10 = arith.constant 0 : index
    %c0_11 = arith.constant 0 : index
    %c0_12 = arith.constant 0 : index
    %11 = vector.load %arg11[%c0_10, %c0_11, %c0_12] : memref<2x8x32xf32, #tpu.memory_space<vmem>>, vector<1x8x32xf32>
    %12 = vector.shape_cast %11 : vector<1x8x32xf32> to vector<8x32xf32>
    %c0_13 = arith.constant 0 : index
    %c0_14 = arith.constant 0 : index
    %c0_15 = arith.constant 0 : index
    %13 = vector.load %arg12[%c0_13, %c0_14, %c0_15] : memref<2x8x32xf32, #tpu.memory_space<vmem>>, vector<1x8x32xf32>
    %14 = vector.shape_cast %13 : vector<1x8x32xf32> to vector<8x32xf32>
    %c0_i32_16 = arith.constant 0 : i32
    %c8_i32 = arith.constant 8 : i32
    %15 = arith.muli %c0_i32_16, %c8_i32 : i32
    %16 = tpu.assume_multiple %15, 8 : i32
    %17 = arith.index_cast %16 : i32 to index
    %c0_17 = arith.constant 0 : index
    %18 = vector.load %arg9[%17, %c0_17] : memref<64x128xf32, #tpu.memory_space<vmem>>, vector<8x128xf32>
    %cst_18 = arith.constant dense<0.000000e+00> : vector<8x128xf32>
    %19 = tpu.matmul %12, %10, %cst_18 {dimension_numbers = #tpu.dot_dimension_numbers<[1], [0], [0], [1], [0, 0, 1, 1], [], []>} : vector<8x32xf32>, vector<32x128xf32>, vector<8x128xf32> -> vector<8x128xf32>
    %20 = arith.addf %18, %19 : vector<8x128xf32>
    %21 = vector.extract_strided_slice %20 {offsets = [0, 0], sizes = [8, 96], strides = [1, 1]} : vector<8x128xf32> to vector<8x96xf32>
    %22 = arith.negf %21 : vector<8x96xf32>
    %23 = math.exp %22 : vector<8x96xf32>
    %cst_19 = arith.constant 1.000000e+00 : f32
    %24 = vector.broadcast %cst_19 : f32 to vector<8x96xf32>
    %25 = arith.addf %24, %23 : vector<8x96xf32>
    %26 = arith.divf %24, %25 : vector<8x96xf32>
    %27 = vector.extract_strided_slice %20 {offsets = [0, 96], sizes = [8, 32], strides = [1, 1]} : vector<8x128xf32> to vector<8x32xf32>
    %28 = math.tanh %27 : vector<8x32xf32>
    %29 = vector.extract_strided_slice %26 {offsets = [0, 0], sizes = [8, 32], strides = [1, 1]} : vector<8x96xf32> to vector<8x32xf32>
    %30 = vector.extract_strided_slice %26 {offsets = [0, 32], sizes = [8, 32], strides = [1, 1]} : vector<8x96xf32> to vector<8x32xf32>
    %31 = vector.extract_strided_slice %26 {offsets = [0, 64], sizes = [8, 32], strides = [1, 1]} : vector<8x96xf32> to vector<8x32xf32>
    %32 = arith.mulf %30, %14 : vector<8x32xf32>
    %33 = arith.mulf %29, %28 : vector<8x32xf32>
    %34 = arith.addf %32, %33 : vector<8x32xf32>
    %35 = math.tanh %34 : vector<8x32xf32>
    %36 = arith.mulf %31, %35 : vector<8x32xf32>
    %37 = arith.index_cast %16 : i32 to index
    %c0_20 = arith.constant 0 : index
    %38 = vector.load %arg10[%37, %c0_20] : memref<64x32xf32, #tpu.memory_space<vmem>>, vector<8x32xf32>
    tpu.vector_store %arg10[%37, %c0_20], %36 {strides = array<i32>} : memref<64x32xf32, #tpu.memory_space<vmem>>, vector<8x32xf32>,
    %c1_i32 = arith.constant 1 : i32
    %c8_i32_21 = arith.constant 8 : i32
    %39 = arith.muli %c1_i32, %c8_i32_21 : i32
    %40 = tpu.assume_multiple %39, 8 : i32
    %41 = arith.index_cast %40 : i32 to index
    %c0_22 = arith.constant 0 : index
    %42 = vector.load %arg9[%41, %c0_22] : memref<64x128xf32, #tpu.memory_space<vmem>>, vector<8x128xf32>
    %cst_23 = arith.constant dense<0.000000e+00> : vector<8x128xf32>
    %43 = tpu.matmul %36, %10, %cst_23 {dimension_numbers = #tpu.dot_dimension_numbers<[1], [0], [0], [1], [0, 0, 1, 1], [], []>} : vector<8x32xf32>, vector<32x128xf32>, vector<8x128xf32> -> vector<8x128xf32>
    %44 = arith.addf %42, %43 : vector<8x128xf32>
    %45 = vector.extract_strided_slice %44 {offsets = [0, 0], sizes = [8, 96], strides = [1, 1]} : vector<8x128xf32> to vector<8x96xf32>
    %46 = arith.negf %45 : vector<8x96xf32>
    %47 = math.exp %46 : vector<8x96xf32>
    %cst_24 = arith.constant 1.000000e+00 : f32
    %48 = vector.broadcast %cst_24 : f32 to vector<8x96xf32>
    %49 = arith.addf %48, %47 : vector<8x96xf32>
    %50 = arith.divf %48, %49 : vector<8x96xf32>
    %51 = vector.extract_strided_slice %44 {offsets = [0, 96], sizes = [8, 32], strides = [1, 1]} : vector<8x128xf32> to vector<8x32xf32>
    %52 = math.tanh %51 : vector<8x32xf32>
    %53 = vector.extract_strided_slice %50 {offsets = [0, 0], sizes = [8, 32], strides = [1, 1]} : vector<8x96xf32> to vector<8x32xf32>
    %54 = vector.extract_strided_slice %50 {offsets = [0, 32], sizes = [8, 32], strides = [1, 1]} : vector<8x96xf32> to vector<8x32xf32>
    %55 = vector.extract_strided_slice %50 {offsets = [0, 64], sizes = [8, 32], strides = [1, 1]} : vector<8x96xf32> to vector<8x32xf32>
    %56 = arith.mulf %54, %34 : vector<8x32xf32>
    %57 = arith.mulf %53, %52 : vector<8x32xf32>
    %58 = arith.addf %56, %57 : vector<8x32xf32>
    %59 = math.tanh %58 : vector<8x32xf32>
    %60 = arith.mulf %55, %59 : vector<8x32xf32>
    %61 = arith.index_cast %40 : i32 to index
    %c0_25 = arith.constant 0 : index
    %62 = vector.load %arg10[%61, %c0_25] : memref<64x32xf32, #tpu.memory_space<vmem>>, vector<8x32xf32>
    tpu.vector_store %arg10[%61, %c0_25], %60 {strides = array<i32>} : memref<64x32xf32, #tpu.memory_space<vmem>>, vector<8x32xf32>,
    %c2_i32 = arith.constant 2 : i32
    %c8_i32_26 = arith.constant 8 : i32
    %63 = arith.muli %c2_i32, %c8_i32_26 : i32
    %64 = tpu.assume_multiple %63, 8 : i32
    %65 = arith.index_cast %64 : i32 to index
    %c0_27 = arith.constant 0 : index
    %66 = vector.load %arg9[%65, %c0_27] : memref<64x128xf32, #tpu.memory_space<vmem>>, vector<8x128xf32>
    %cst_28 = arith.constant dense<0.000000e+00> : vector<8x128xf32>
    %67 = tpu.matmul %60, %10, %cst_28 {dimension_numbers = #tpu.dot_dimension_numbers<[1], [0], [0], [1], [0, 0, 1, 1], [], []>} : vector<8x32xf32>, vector<32x128xf32>, vector<8x128xf32> -> vector<8x128xf32>
    %68 = arith.addf %66, %67 : vector<8x128xf32>
    %69 = vector.extract_strided_slice %68 {offsets = [0, 0], sizes = [8, 96], strides = [1, 1]} : vector<8x128xf32> to vector<8x96xf32>
    %70 = arith.negf %69 : vector<8x96xf32>
    %71 = math.exp %70 : vector<8x96xf32>
    %cst_29 = arith.constant 1.000000e+00 : f32
    %72 = vector.broadcast %cst_29 : f32 to vector<8x96xf32>
    %73 = arith.addf %72, %71 : vector<8x96xf32>
    %74 = arith.divf %72, %73 : vector<8x96xf32>
    %75 = vector.extract_strided_slice %68 {offsets = [0, 96], sizes = [8, 32], strides = [1, 1]} : vector<8x128xf32> to vector<8x32xf32>
    %76 = math.tanh %75 : vector<8x32xf32>
    %77 = vector.extract_strided_slice %74 {offsets = [0, 0], sizes = [8, 32], strides = [1, 1]} : vector<8x96xf32> to vector<8x32xf32>
    %78 = vector.extract_strided_slice %74 {offsets = [0, 32], sizes = [8, 32], strides = [1, 1]} : vector<8x96xf32> to vector<8x32xf32>
    %79 = vector.extract_strided_slice %74 {offsets = [0, 64], sizes = [8, 32], strides = [1, 1]} : vector<8x96xf32> to vector<8x32xf32>
    %80 = arith.mulf %78, %58 : vector<8x32xf32>
    %81 = arith.mulf %77, %76 : vector<8x32xf32>
    %82 = arith.addf %80, %81 : vector<8x32xf32>
    %83 = math.tanh %82 : vector<8x32xf32>
    %84 = arith.mulf %79, %83 : vector<8x32xf32>
    %85 = arith.index_cast %64 : i32 to index
    %c0_30 = arith.constant 0 : index
    %86 = vector.load %arg10[%85, %c0_30] : memref<64x32xf32, #tpu.memory_space<vmem>>, vector<8x32xf32>
    tpu.vector_store %arg10[%85, %c0_30], %84 {strides = array<i32>} : memref<64x32xf32, #tpu.memory_space<vmem>>, vector<8x32xf32>,
    %c3_i32 = arith.constant 3 : i32
    %c8_i32_31 = arith.constant 8 : i32
    %87 = arith.muli %c3_i32, %c8_i32_31 : i32
    %88 = tpu.assume_multiple %87, 8 : i32
    %89 = arith.index_cast %88 : i32 to index
    %c0_32 = arith.constant 0 : index
    %90 = vector.load %arg9[%89, %c0_32] : memref<64x128xf32, #tpu.memory_space<vmem>>, vector<8x128xf32>
    %cst_33 = arith.constant dense<0.000000e+00> : vector<8x128xf32>
    %91 = tpu.matmul %84, %10, %cst_33 {dimension_numbers = #tpu.dot_dimension_numbers<[1], [0], [0], [1], [0, 0, 1, 1], [], []>} : vector<8x32xf32>, vector<32x128xf32>, vector<8x128xf32> -> vector<8x128xf32>
    %92 = arith.addf %90, %91 : vector<8x128xf32>
    %93 = vector.extract_strided_slice %92 {offsets = [0, 0], sizes = [8, 96], strides = [1, 1]} : vector<8x128xf32> to vector<8x96xf32>
    %94 = arith.negf %93 : vector<8x96xf32>
    %95 = math.exp %94 : vector<8x96xf32>
    %cst_34 = arith.constant 1.000000e+00 : f32
    %96 = vector.broadcast %cst_34 : f32 to vector<8x96xf32>
    %97 = arith.addf %96, %95 : vector<8x96xf32>
    %98 = arith.divf %96, %97 : vector<8x96xf32>
    %99 = vector.extract_strided_slice %92 {offsets = [0, 96], sizes = [8, 32], strides = [1, 1]} : vector<8x128xf32> to vector<8x32xf32>
    %100 = math.tanh %99 : vector<8x32xf32>
    %101 = vector.extract_strided_slice %98 {offsets = [0, 0], sizes = [8, 32], strides = [1, 1]} : vector<8x96xf32> to vector<8x32xf32>
    %102 = vector.extract_strided_slice %98 {offsets = [0, 32], sizes = [8, 32], strides = [1, 1]} : vector<8x96xf32> to vector<8x32xf32>
    %103 = vector.extract_strided_slice %98 {offsets = [0, 64], sizes = [8, 32], strides = [1, 1]} : vector<8x96xf32> to vector<8x32xf32>
    %104 = arith.mulf %102, %82 : vector<8x32xf32>
    %105 = arith.mulf %101, %100 : vector<8x32xf32>
    %106 = arith.addf %104, %105 : vector<8x32xf32>
    %107 = math.tanh %106 : vector<8x32xf32>
    %108 = arith.mulf %103, %107 : vector<8x32xf32>
    %109 = arith.index_cast %88 : i32 to index
    %c0_35 = arith.constant 0 : index
    %110 = vector.load %arg10[%109, %c0_35] : memref<64x32xf32, #tpu.memory_space<vmem>>, vector<8x32xf32>
    tpu.vector_store %arg10[%109, %c0_35], %108 {strides = array<i32>} : memref<64x32xf32, #tpu.memory_space<vmem>>, vector<8x32xf32>,
    %c4_i32 = arith.constant 4 : i32
    %c8_i32_36 = arith.constant 8 : i32
    %111 = arith.muli %c4_i32, %c8_i32_36 : i32
    %112 = tpu.assume_multiple %111, 8 : i32
    %113 = arith.index_cast %112 : i32 to index
    %c0_37 = arith.constant 0 : index
    %114 = vector.load %arg9[%113, %c0_37] : memref<64x128xf32, #tpu.memory_space<vmem>>, vector<8x128xf32>
    %cst_38 = arith.constant dense<0.000000e+00> : vector<8x128xf32>
    %115 = tpu.matmul %108, %10, %cst_38 {dimension_numbers = #tpu.dot_dimension_numbers<[1], [0], [0], [1], [0, 0, 1, 1], [], []>} : vector<8x32xf32>, vector<32x128xf32>, vector<8x128xf32> -> vector<8x128xf32>
    %116 = arith.addf %114, %115 : vector<8x128xf32>
    %117 = vector.extract_strided_slice %116 {offsets = [0, 0], sizes = [8, 96], strides = [1, 1]} : vector<8x128xf32> to vector<8x96xf32>
    %118 = arith.negf %117 : vector<8x96xf32>
    %119 = math.exp %118 : vector<8x96xf32>
    %cst_39 = arith.constant 1.000000e+00 : f32
    %120 = vector.broadcast %cst_39 : f32 to vector<8x96xf32>
    %121 = arith.addf %120, %119 : vector<8x96xf32>
    %122 = arith.divf %120, %121 : vector<8x96xf32>
    %123 = vector.extract_strided_slice %116 {offsets = [0, 96], sizes = [8, 32], strides = [1, 1]} : vector<8x128xf32> to vector<8x32xf32>
    %124 = math.tanh %123 : vector<8x32xf32>
    %125 = vector.extract_strided_slice %122 {offsets = [0, 0], sizes = [8, 32], strides = [1, 1]} : vector<8x96xf32> to vector<8x32xf32>
    %126 = vector.extract_strided_slice %122 {offsets = [0, 32], sizes = [8, 32], strides = [1, 1]} : vector<8x96xf32> to vector<8x32xf32>
    %127 = vector.extract_strided_slice %122 {offsets = [0, 64], sizes = [8, 32], strides = [1, 1]} : vector<8x96xf32> to vector<8x32xf32>
    %128 = arith.mulf %126, %106 : vector<8x32xf32>
    %129 = arith.mulf %125, %124 : vector<8x32xf32>
    %130 = arith.addf %128, %129 : vector<8x32xf32>
    %131 = math.tanh %130 : vector<8x32xf32>
    %132 = arith.mulf %127, %131 : vector<8x32xf32>
    %133 = arith.index_cast %112 : i32 to index
    %c0_40 = arith.constant 0 : index
    %134 = vector.load %arg10[%133, %c0_40] : memref<64x32xf32, #tpu.memory_space<vmem>>, vector<8x32xf32>
    tpu.vector_store %arg10[%133, %c0_40], %132 {strides = array<i32>} : memref<64x32xf32, #tpu.memory_space<vmem>>, vector<8x32xf32>,
    %c5_i32 = arith.constant 5 : i32
    %c8_i32_41 = arith.constant 8 : i32
    %135 = arith.muli %c5_i32, %c8_i32_41 : i32
    %136 = tpu.assume_multiple %135, 8 : i32
    %137 = arith.index_cast %136 : i32 to index
    %c0_42 = arith.constant 0 : index
    %138 = vector.load %arg9[%137, %c0_42] : memref<64x128xf32, #tpu.memory_space<vmem>>, vector<8x128xf32>
    %cst_43 = arith.constant dense<0.000000e+00> : vector<8x128xf32>
    %139 = tpu.matmul %132, %10, %cst_43 {dimension_numbers = #tpu.dot_dimension_numbers<[1], [0], [0], [1], [0, 0, 1, 1], [], []>} : vector<8x32xf32>, vector<32x128xf32>, vector<8x128xf32> -> vector<8x128xf32>
    %140 = arith.addf %138, %139 : vector<8x128xf32>
    %141 = vector.extract_strided_slice %140 {offsets = [0, 0], sizes = [8, 96], strides = [1, 1]} : vector<8x128xf32> to vector<8x96xf32>
    %142 = arith.negf %141 : vector<8x96xf32>
    %143 = math.exp %142 : vector<8x96xf32>
    %cst_44 = arith.constant 1.000000e+00 : f32
    %144 = vector.broadcast %cst_44 : f32 to vector<8x96xf32>
    %145 = arith.addf %144, %143 : vector<8x96xf32>
    %146 = arith.divf %144, %145 : vector<8x96xf32>
    %147 = vector.extract_strided_slice %140 {offsets = [0, 96], sizes = [8, 32], strides = [1, 1]} : vector<8x128xf32> to vector<8x32xf32>
    %148 = math.tanh %147 : vector<8x32xf32>
    %149 = vector.extract_strided_slice %146 {offsets = [0, 0], sizes = [8, 32], strides = [1, 1]} : vector<8x96xf32> to vector<8x32xf32>
    %150 = vector.extract_strided_slice %146 {offsets = [0, 32], sizes = [8, 32], strides = [1, 1]} : vector<8x96xf32> to vector<8x32xf32>
    %151 = vector.extract_strided_slice %146 {offsets = [0, 64], sizes = [8, 32], strides = [1, 1]} : vector<8x96xf32> to vector<8x32xf32>
    %152 = arith.mulf %150, %130 : vector<8x32xf32>
    %153 = arith.mulf %149, %148 : vector<8x32xf32>
    %154 = arith.addf %152, %153 : vector<8x32xf32>
    %155 = math.tanh %154 : vector<8x32xf32>
    %156 = arith.mulf %151, %155 : vector<8x32xf32>
    %157 = arith.index_cast %136 : i32 to index
    %c0_45 = arith.constant 0 : index
    %158 = vector.load %arg10[%157, %c0_45] : memref<64x32xf32, #tpu.memory_space<vmem>>, vector<8x32xf32>
    tpu.vector_store %arg10[%157, %c0_45], %156 {strides = array<i32>} : memref<64x32xf32, #tpu.memory_space<vmem>>, vector<8x32xf32>,
    %c6_i32 = arith.constant 6 : i32
    %c8_i32_46 = arith.constant 8 : i32
    %159 = arith.muli %c6_i32, %c8_i32_46 : i32
    %160 = tpu.assume_multiple %159, 8 : i32
    %161 = arith.index_cast %160 : i32 to index
    %c0_47 = arith.constant 0 : index
    %162 = vector.load %arg9[%161, %c0_47] : memref<64x128xf32, #tpu.memory_space<vmem>>, vector<8x128xf32>
    %cst_48 = arith.constant dense<0.000000e+00> : vector<8x128xf32>
    %163 = tpu.matmul %156, %10, %cst_48 {dimension_numbers = #tpu.dot_dimension_numbers<[1], [0], [0], [1], [0, 0, 1, 1], [], []>} : vector<8x32xf32>, vector<32x128xf32>, vector<8x128xf32> -> vector<8x128xf32>
    %164 = arith.addf %162, %163 : vector<8x128xf32>
    %165 = vector.extract_strided_slice %164 {offsets = [0, 0], sizes = [8, 96], strides = [1, 1]} : vector<8x128xf32> to vector<8x96xf32>
    %166 = arith.negf %165 : vector<8x96xf32>
    %167 = math.exp %166 : vector<8x96xf32>
    %cst_49 = arith.constant 1.000000e+00 : f32
    %168 = vector.broadcast %cst_49 : f32 to vector<8x96xf32>
    %169 = arith.addf %168, %167 : vector<8x96xf32>
    %170 = arith.divf %168, %169 : vector<8x96xf32>
    %171 = vector.extract_strided_slice %164 {offsets = [0, 96], sizes = [8, 32], strides = [1, 1]} : vector<8x128xf32> to vector<8x32xf32>
    %172 = math.tanh %171 : vector<8x32xf32>
    %173 = vector.extract_strided_slice %170 {offsets = [0, 0], sizes = [8, 32], strides = [1, 1]} : vector<8x96xf32> to vector<8x32xf32>
    %174 = vector.extract_strided_slice %170 {offsets = [0, 32], sizes = [8, 32], strides = [1, 1]} : vector<8x96xf32> to vector<8x32xf32>
    %175 = vector.extract_strided_slice %170 {offsets = [0, 64], sizes = [8, 32], strides = [1, 1]} : vector<8x96xf32> to vector<8x32xf32>
    %176 = arith.mulf %174, %154 : vector<8x32xf32>
    %177 = arith.mulf %173, %172 : vector<8x32xf32>
    %178 = arith.addf %176, %177 : vector<8x32xf32>
    %179 = math.tanh %178 : vector<8x32xf32>
    %180 = arith.mulf %175, %179 : vector<8x32xf32>
    %181 = arith.index_cast %160 : i32 to index
    %c0_50 = arith.constant 0 : index
    %182 = vector.load %arg10[%181, %c0_50] : memref<64x32xf32, #tpu.memory_space<vmem>>, vector<8x32xf32>
    tpu.vector_store %arg10[%181, %c0_50], %180 {strides = array<i32>} : memref<64x32xf32, #tpu.memory_space<vmem>>, vector<8x32xf32>,
    %c7_i32 = arith.constant 7 : i32
    %c8_i32_51 = arith.constant 8 : i32
    %183 = arith.muli %c7_i32, %c8_i32_51 : i32
    %184 = tpu.assume_multiple %183, 8 : i32
    %185 = arith.index_cast %184 : i32 to index
    %c0_52 = arith.constant 0 : index
    %186 = vector.load %arg9[%185, %c0_52] : memref<64x128xf32, #tpu.memory_space<vmem>>, vector<8x128xf32>
    %cst_53 = arith.constant dense<0.000000e+00> : vector<8x128xf32>
    %187 = tpu.matmul %180, %10, %cst_53 {dimension_numbers = #tpu.dot_dimension_numbers<[1], [0], [0], [1], [0, 0, 1, 1], [], []>} : vector<8x32xf32>, vector<32x128xf32>, vector<8x128xf32> -> vector<8x128xf32>
    %188 = arith.addf %186, %187 : vector<8x128xf32>
    %189 = vector.extract_strided_slice %188 {offsets = [0, 0], sizes = [8, 96], strides = [1, 1]} : vector<8x128xf32> to vector<8x96xf32>
    %190 = arith.negf %189 : vector<8x96xf32>
    %191 = math.exp %190 : vector<8x96xf32>
    %cst_54 = arith.constant 1.000000e+00 : f32
    %192 = vector.broadcast %cst_54 : f32 to vector<8x96xf32>
    %193 = arith.addf %192, %191 : vector<8x96xf32>
    %194 = arith.divf %192, %193 : vector<8x96xf32>
    %195 = vector.extract_strided_slice %188 {offsets = [0, 96], sizes = [8, 32], strides = [1, 1]} : vector<8x128xf32> to vector<8x32xf32>
    %196 = math.tanh %195 : vector<8x32xf32>
    %197 = vector.extract_strided_slice %194 {offsets = [0, 0], sizes = [8, 32], strides = [1, 1]} : vector<8x96xf32> to vector<8x32xf32>
    %198 = vector.extract_strided_slice %194 {offsets = [0, 32], sizes = [8, 32], strides = [1, 1]} : vector<8x96xf32> to vector<8x32xf32>
    %199 = vector.extract_strided_slice %194 {offsets = [0, 64], sizes = [8, 32], strides = [1, 1]} : vector<8x96xf32> to vector<8x32xf32>
    %200 = arith.mulf %198, %178 : vector<8x32xf32>
    %201 = arith.mulf %197, %196 : vector<8x32xf32>
    %202 = arith.addf %200, %201 : vector<8x32xf32>
    %203 = math.tanh %202 : vector<8x32xf32>
    %204 = arith.mulf %199, %203 : vector<8x32xf32>
    %205 = arith.index_cast %184 : i32 to index
    %c0_55 = arith.constant 0 : index
    %206 = vector.load %arg10[%205, %c0_55] : memref<64x32xf32, #tpu.memory_space<vmem>>, vector<8x32xf32>
    tpu.vector_store %arg10[%205, %c0_55], %204 {strides = array<i32>} : memref<64x32xf32, #tpu.memory_space<vmem>>, vector<8x32xf32>,
    %c8_i32_56 = arith.constant 8 : i32
    %c0_57 = arith.constant 0 : index
    %c0_58 = arith.constant 0 : index
    %c0_59 = arith.constant 0 : index
    %207 = vector.load %arg11[%c0_57, %c0_58, %c0_59] : memref<2x8x32xf32, #tpu.memory_space<vmem>>, vector<1x8x32xf32>
    %208 = vector.shape_cast %207 : vector<1x8x32xf32> to vector<8x32xf32>
    %209 = vector.shape_cast %204 : vector<8x32xf32> to vector<1x8x32xf32>
    tpu.vector_store %arg11[%c0_57, %c0_58, %c0_59], %209 {strides = array<i32>} : memref<2x8x32xf32, #tpu.memory_space<vmem>>, vector<1x8x32xf32>,
    %c0_60 = arith.constant 0 : index
    %c0_61 = arith.constant 0 : index
    %c0_62 = arith.constant 0 : index
    %210 = vector.load %arg12[%c0_60, %c0_61, %c0_62] : memref<2x8x32xf32, #tpu.memory_space<vmem>>, vector<1x8x32xf32>
    %211 = vector.shape_cast %210 : vector<1x8x32xf32> to vector<8x32xf32>
    %212 = vector.shape_cast %202 : vector<8x32xf32> to vector<1x8x32xf32>
    tpu.vector_store %arg12[%c0_60, %c0_61, %c0_62], %212 {strides = array<i32>} : memref<2x8x32xf32, #tpu.memory_space<vmem>>, vector<1x8x32xf32>,
    %c0_63 = arith.constant 0 : index
    %c0_64 = arith.constant 0 : index
    %213 = vector.load %arg10[%c0_63, %c0_64] : memref<64x32xf32, #tpu.memory_space<vmem>>, vector<64x32xf32>
    %c0_65 = arith.constant 0 : index
    %c0_66 = arith.constant 0 : index
    %214 = vector.load %arg5[%c0_65, %c0_66] : memref<32x128xf32, #tpu.memory_space<vmem>>, vector<32x128xf32>
    %cst_67 = arith.constant dense<0.000000e+00> : vector<64x128xf32>
    %215 = tpu.matmul %213, %214, %cst_67 {dimension_numbers = #tpu.dot_dimension_numbers<[1], [0], [0], [1], [0, 0, 1, 1], [], []>} : vector<64x32xf32>, vector<32x128xf32>, vector<64x128xf32> -> vector<64x128xf32>
    %c0_68 = arith.constant 0 : index
    %c0_69 = arith.constant 0 : index
    %216 = vector.load %arg7[%c0_68, %c0_69] : memref<1x128xf32, #tpu.memory_space<vmem>>, vector<1x128xf32>
    %217 = vector.broadcast %216 : vector<1x128xf32> to vector<64x128xf32>
    %218 = arith.addf %215, %217 : vector<64x128xf32>
    %c0_70 = arith.constant 0 : index
    %c0_71 = arith.constant 0 : index
    %219 = vector.load %arg9[%c0_70, %c0_71] : memref<64x128xf32, #tpu.memory_space<vmem>>, vector<64x128xf32>
    tpu.vector_store %arg9[%c0_70, %c0_71], %218 {strides = array<i32>} : memref<64x128xf32, #tpu.memory_space<vmem>>, vector<64x128xf32>,
    %c0_72 = arith.constant 0 : index
    %c0_73 = arith.constant 0 : index
    %220 = vector.load %arg6[%c0_72, %c0_73] : memref<32x128xf32, #tpu.memory_space<vmem>>, vector<32x128xf32>
    %c1 = arith.constant 1 : index
    %c0_74 = arith.constant 0 : index
    %c0_75 = arith.constant 0 : index
    %221 = vector.load %arg11[%c1, %c0_74, %c0_75] : memref<2x8x32xf32, #tpu.memory_space<vmem>>, vector<1x8x32xf32>
    %222 = vector.shape_cast %221 : vector<1x8x32xf32> to vector<8x32xf32>
    %c1_76 = arith.constant 1 : index
    %c0_77 = arith.constant 0 : index
    %c0_78 = arith.constant 0 : index
    %223 = vector.load %arg12[%c1_76, %c0_77, %c0_78] : memref<2x8x32xf32, #tpu.memory_space<vmem>>, vector<1x8x32xf32>
    %224 = vector.shape_cast %223 : vector<1x8x32xf32> to vector<8x32xf32>
    %c0_i32_79 = arith.constant 0 : i32
    %c8_i32_80 = arith.constant 8 : i32
    %225 = arith.muli %c0_i32_79, %c8_i32_80 : i32
    %226 = tpu.assume_multiple %225, 8 : i32
    %227 = arith.index_cast %226 : i32 to index
    %c0_81 = arith.constant 0 : index
    %228 = vector.load %arg9[%227, %c0_81] : memref<64x128xf32, #tpu.memory_space<vmem>>, vector<8x128xf32>
    %cst_82 = arith.constant dense<0.000000e+00> : vector<8x128xf32>
    %229 = tpu.matmul %222, %220, %cst_82 {dimension_numbers = #tpu.dot_dimension_numbers<[1], [0], [0], [1], [0, 0, 1, 1], [], []>} : vector<8x32xf32>, vector<32x128xf32>, vector<8x128xf32> -> vector<8x128xf32>
    %230 = arith.addf %228, %229 : vector<8x128xf32>
    %231 = vector.extract_strided_slice %230 {offsets = [0, 0], sizes = [8, 96], strides = [1, 1]} : vector<8x128xf32> to vector<8x96xf32>
    %232 = arith.negf %231 : vector<8x96xf32>
    %233 = math.exp %232 : vector<8x96xf32>
    %cst_83 = arith.constant 1.000000e+00 : f32
    %234 = vector.broadcast %cst_83 : f32 to vector<8x96xf32>
    %235 = arith.addf %234, %233 : vector<8x96xf32>
    %236 = arith.divf %234, %235 : vector<8x96xf32>
    %237 = vector.extract_strided_slice %230 {offsets = [0, 96], sizes = [8, 32], strides = [1, 1]} : vector<8x128xf32> to vector<8x32xf32>
    %238 = math.tanh %237 : vector<8x32xf32>
    %239 = vector.extract_strided_slice %236 {offsets = [0, 0], sizes = [8, 32], strides = [1, 1]} : vector<8x96xf32> to vector<8x32xf32>
    %240 = vector.extract_strided_slice %236 {offsets = [0, 32], sizes = [8, 32], strides = [1, 1]} : vector<8x96xf32> to vector<8x32xf32>
    %241 = vector.extract_strided_slice %236 {offsets = [0, 64], sizes = [8, 32], strides = [1, 1]} : vector<8x96xf32> to vector<8x32xf32>
    %242 = arith.mulf %240, %224 : vector<8x32xf32>
    %243 = arith.mulf %239, %238 : vector<8x32xf32>
    %244 = arith.addf %242, %243 : vector<8x32xf32>
    %245 = math.tanh %244 : vector<8x32xf32>
    %246 = arith.mulf %241, %245 : vector<8x32xf32>
    %247 = arith.index_cast %226 : i32 to index
    %c0_84 = arith.constant 0 : index
    %248 = vector.load %arg8[%247, %c0_84] : memref<64x32xf32, #tpu.memory_space<vmem>>, vector<8x32xf32>
    tpu.vector_store %arg8[%247, %c0_84], %246 {strides = array<i32>} : memref<64x32xf32, #tpu.memory_space<vmem>>, vector<8x32xf32>,
    %c1_i32_85 = arith.constant 1 : i32
    %c8_i32_86 = arith.constant 8 : i32
    %249 = arith.muli %c1_i32_85, %c8_i32_86 : i32
    %250 = tpu.assume_multiple %249, 8 : i32
    %251 = arith.index_cast %250 : i32 to index
    %c0_87 = arith.constant 0 : index
    %252 = vector.load %arg9[%251, %c0_87] : memref<64x128xf32, #tpu.memory_space<vmem>>, vector<8x128xf32>
    %cst_88 = arith.constant dense<0.000000e+00> : vector<8x128xf32>
    %253 = tpu.matmul %246, %220, %cst_88 {dimension_numbers = #tpu.dot_dimension_numbers<[1], [0], [0], [1], [0, 0, 1, 1], [], []>} : vector<8x32xf32>, vector<32x128xf32>, vector<8x128xf32> -> vector<8x128xf32>
    %254 = arith.addf %252, %253 : vector<8x128xf32>
    %255 = vector.extract_strided_slice %254 {offsets = [0, 0], sizes = [8, 96], strides = [1, 1]} : vector<8x128xf32> to vector<8x96xf32>
    %256 = arith.negf %255 : vector<8x96xf32>
    %257 = math.exp %256 : vector<8x96xf32>
    %cst_89 = arith.constant 1.000000e+00 : f32
    %258 = vector.broadcast %cst_89 : f32 to vector<8x96xf32>
    %259 = arith.addf %258, %257 : vector<8x96xf32>
    %260 = arith.divf %258, %259 : vector<8x96xf32>
    %261 = vector.extract_strided_slice %254 {offsets = [0, 96], sizes = [8, 32], strides = [1, 1]} : vector<8x128xf32> to vector<8x32xf32>
    %262 = math.tanh %261 : vector<8x32xf32>
    %263 = vector.extract_strided_slice %260 {offsets = [0, 0], sizes = [8, 32], strides = [1, 1]} : vector<8x96xf32> to vector<8x32xf32>
    %264 = vector.extract_strided_slice %260 {offsets = [0, 32], sizes = [8, 32], strides = [1, 1]} : vector<8x96xf32> to vector<8x32xf32>
    %265 = vector.extract_strided_slice %260 {offsets = [0, 64], sizes = [8, 32], strides = [1, 1]} : vector<8x96xf32> to vector<8x32xf32>
    %266 = arith.mulf %264, %244 : vector<8x32xf32>
    %267 = arith.mulf %263, %262 : vector<8x32xf32>
    %268 = arith.addf %266, %267 : vector<8x32xf32>
    %269 = math.tanh %268 : vector<8x32xf32>
    %270 = arith.mulf %265, %269 : vector<8x32xf32>
    %271 = arith.index_cast %250 : i32 to index
    %c0_90 = arith.constant 0 : index
    %272 = vector.load %arg8[%271, %c0_90] : memref<64x32xf32, #tpu.memory_space<vmem>>, vector<8x32xf32>
    tpu.vector_store %arg8[%271, %c0_90], %270 {strides = array<i32>} : memref<64x32xf32, #tpu.memory_space<vmem>>, vector<8x32xf32>,
    %c2_i32_91 = arith.constant 2 : i32
    %c8_i32_92 = arith.constant 8 : i32
    %273 = arith.muli %c2_i32_91, %c8_i32_92 : i32
    %274 = tpu.assume_multiple %273, 8 : i32
    %275 = arith.index_cast %274 : i32 to index
    %c0_93 = arith.constant 0 : index
    %276 = vector.load %arg9[%275, %c0_93] : memref<64x128xf32, #tpu.memory_space<vmem>>, vector<8x128xf32>
    %cst_94 = arith.constant dense<0.000000e+00> : vector<8x128xf32>
    %277 = tpu.matmul %270, %220, %cst_94 {dimension_numbers = #tpu.dot_dimension_numbers<[1], [0], [0], [1], [0, 0, 1, 1], [], []>} : vector<8x32xf32>, vector<32x128xf32>, vector<8x128xf32> -> vector<8x128xf32>
    %278 = arith.addf %276, %277 : vector<8x128xf32>
    %279 = vector.extract_strided_slice %278 {offsets = [0, 0], sizes = [8, 96], strides = [1, 1]} : vector<8x128xf32> to vector<8x96xf32>
    %280 = arith.negf %279 : vector<8x96xf32>
    %281 = math.exp %280 : vector<8x96xf32>
    %cst_95 = arith.constant 1.000000e+00 : f32
    %282 = vector.broadcast %cst_95 : f32 to vector<8x96xf32>
    %283 = arith.addf %282, %281 : vector<8x96xf32>
    %284 = arith.divf %282, %283 : vector<8x96xf32>
    %285 = vector.extract_strided_slice %278 {offsets = [0, 96], sizes = [8, 32], strides = [1, 1]} : vector<8x128xf32> to vector<8x32xf32>
    %286 = math.tanh %285 : vector<8x32xf32>
    %287 = vector.extract_strided_slice %284 {offsets = [0, 0], sizes = [8, 32], strides = [1, 1]} : vector<8x96xf32> to vector<8x32xf32>
    %288 = vector.extract_strided_slice %284 {offsets = [0, 32], sizes = [8, 32], strides = [1, 1]} : vector<8x96xf32> to vector<8x32xf32>
    %289 = vector.extract_strided_slice %284 {offsets = [0, 64], sizes = [8, 32], strides = [1, 1]} : vector<8x96xf32> to vector<8x32xf32>
    %290 = arith.mulf %288, %268 : vector<8x32xf32>
    %291 = arith.mulf %287, %286 : vector<8x32xf32>
    %292 = arith.addf %290, %291 : vector<8x32xf32>
    %293 = math.tanh %292 : vector<8x32xf32>
    %294 = arith.mulf %289, %293 : vector<8x32xf32>
    %295 = arith.index_cast %274 : i32 to index
    %c0_96 = arith.constant 0 : index
    %296 = vector.load %arg8[%295, %c0_96] : memref<64x32xf32, #tpu.memory_space<vmem>>, vector<8x32xf32>
    tpu.vector_store %arg8[%295, %c0_96], %294 {strides = array<i32>} : memref<64x32xf32, #tpu.memory_space<vmem>>, vector<8x32xf32>,
    %c3_i32_97 = arith.constant 3 : i32
    %c8_i32_98 = arith.constant 8 : i32
    %297 = arith.muli %c3_i32_97, %c8_i32_98 : i32
    %298 = tpu.assume_multiple %297, 8 : i32
    %299 = arith.index_cast %298 : i32 to index
    %c0_99 = arith.constant 0 : index
    %300 = vector.load %arg9[%299, %c0_99] : memref<64x128xf32, #tpu.memory_space<vmem>>, vector<8x128xf32>
    %cst_100 = arith.constant dense<0.000000e+00> : vector<8x128xf32>
    %301 = tpu.matmul %294, %220, %cst_100 {dimension_numbers = #tpu.dot_dimension_numbers<[1], [0], [0], [1], [0, 0, 1, 1], [], []>} : vector<8x32xf32>, vector<32x128xf32>, vector<8x128xf32> -> vector<8x128xf32>
    %302 = arith.addf %300, %301 : vector<8x128xf32>
    %303 = vector.extract_strided_slice %302 {offsets = [0, 0], sizes = [8, 96], strides = [1, 1]} : vector<8x128xf32> to vector<8x96xf32>
    %304 = arith.negf %303 : vector<8x96xf32>
    %305 = math.exp %304 : vector<8x96xf32>
    %cst_101 = arith.constant 1.000000e+00 : f32
    %306 = vector.broadcast %cst_101 : f32 to vector<8x96xf32>
    %307 = arith.addf %306, %305 : vector<8x96xf32>
    %308 = arith.divf %306, %307 : vector<8x96xf32>
    %309 = vector.extract_strided_slice %302 {offsets = [0, 96], sizes = [8, 32], strides = [1, 1]} : vector<8x128xf32> to vector<8x32xf32>
    %310 = math.tanh %309 : vector<8x32xf32>
    %311 = vector.extract_strided_slice %308 {offsets = [0, 0], sizes = [8, 32], strides = [1, 1]} : vector<8x96xf32> to vector<8x32xf32>
    %312 = vector.extract_strided_slice %308 {offsets = [0, 32], sizes = [8, 32], strides = [1, 1]} : vector<8x96xf32> to vector<8x32xf32>
    %313 = vector.extract_strided_slice %308 {offsets = [0, 64], sizes = [8, 32], strides = [1, 1]} : vector<8x96xf32> to vector<8x32xf32>
    %314 = arith.mulf %312, %292 : vector<8x32xf32>
    %315 = arith.mulf %311, %310 : vector<8x32xf32>
    %316 = arith.addf %314, %315 : vector<8x32xf32>
    %317 = math.tanh %316 : vector<8x32xf32>
    %318 = arith.mulf %313, %317 : vector<8x32xf32>
    %319 = arith.index_cast %298 : i32 to index
    %c0_102 = arith.constant 0 : index
    %320 = vector.load %arg8[%319, %c0_102] : memref<64x32xf32, #tpu.memory_space<vmem>>, vector<8x32xf32>
    tpu.vector_store %arg8[%319, %c0_102], %318 {strides = array<i32>} : memref<64x32xf32, #tpu.memory_space<vmem>>, vector<8x32xf32>,
    %c4_i32_103 = arith.constant 4 : i32
    %c8_i32_104 = arith.constant 8 : i32
    %321 = arith.muli %c4_i32_103, %c8_i32_104 : i32
    %322 = tpu.assume_multiple %321, 8 : i32
    %323 = arith.index_cast %322 : i32 to index
    %c0_105 = arith.constant 0 : index
    %324 = vector.load %arg9[%323, %c0_105] : memref<64x128xf32, #tpu.memory_space<vmem>>, vector<8x128xf32>
    %cst_106 = arith.constant dense<0.000000e+00> : vector<8x128xf32>
    %325 = tpu.matmul %318, %220, %cst_106 {dimension_numbers = #tpu.dot_dimension_numbers<[1], [0], [0], [1], [0, 0, 1, 1], [], []>} : vector<8x32xf32>, vector<32x128xf32>, vector<8x128xf32> -> vector<8x128xf32>
    %326 = arith.addf %324, %325 : vector<8x128xf32>
    %327 = vector.extract_strided_slice %326 {offsets = [0, 0], sizes = [8, 96], strides = [1, 1]} : vector<8x128xf32> to vector<8x96xf32>
    %328 = arith.negf %327 : vector<8x96xf32>
    %329 = math.exp %328 : vector<8x96xf32>
    %cst_107 = arith.constant 1.000000e+00 : f32
    %330 = vector.broadcast %cst_107 : f32 to vector<8x96xf32>
    %331 = arith.addf %330, %329 : vector<8x96xf32>
    %332 = arith.divf %330, %331 : vector<8x96xf32>
    %333 = vector.extract_strided_slice %326 {offsets = [0, 96], sizes = [8, 32], strides = [1, 1]} : vector<8x128xf32> to vector<8x32xf32>
    %334 = math.tanh %333 : vector<8x32xf32>
    %335 = vector.extract_strided_slice %332 {offsets = [0, 0], sizes = [8, 32], strides = [1, 1]} : vector<8x96xf32> to vector<8x32xf32>
    %336 = vector.extract_strided_slice %332 {offsets = [0, 32], sizes = [8, 32], strides = [1, 1]} : vector<8x96xf32> to vector<8x32xf32>
    %337 = vector.extract_strided_slice %332 {offsets = [0, 64], sizes = [8, 32], strides = [1, 1]} : vector<8x96xf32> to vector<8x32xf32>
    %338 = arith.mulf %336, %316 : vector<8x32xf32>
    %339 = arith.mulf %335, %334 : vector<8x32xf32>
    %340 = arith.addf %338, %339 : vector<8x32xf32>
    %341 = math.tanh %340 : vector<8x32xf32>
    %342 = arith.mulf %337, %341 : vector<8x32xf32>
    %343 = arith.index_cast %322 : i32 to index
    %c0_108 = arith.constant 0 : index
    %344 = vector.load %arg8[%343, %c0_108] : memref<64x32xf32, #tpu.memory_space<vmem>>, vector<8x32xf32>
    tpu.vector_store %arg8[%343, %c0_108], %342 {strides = array<i32>} : memref<64x32xf32, #tpu.memory_space<vmem>>, vector<8x32xf32>,
    %c5_i32_109 = arith.constant 5 : i32
    %c8_i32_110 = arith.constant 8 : i32
    %345 = arith.muli %c5_i32_109, %c8_i32_110 : i32
    %346 = tpu.assume_multiple %345, 8 : i32
    %347 = arith.index_cast %346 : i32 to index
    %c0_111 = arith.constant 0 : index
    %348 = vector.load %arg9[%347, %c0_111] : memref<64x128xf32, #tpu.memory_space<vmem>>, vector<8x128xf32>
    %cst_112 = arith.constant dense<0.000000e+00> : vector<8x128xf32>
    %349 = tpu.matmul %342, %220, %cst_112 {dimension_numbers = #tpu.dot_dimension_numbers<[1], [0], [0], [1], [0, 0, 1, 1], [], []>} : vector<8x32xf32>, vector<32x128xf32>, vector<8x128xf32> -> vector<8x128xf32>
    %350 = arith.addf %348, %349 : vector<8x128xf32>
    %351 = vector.extract_strided_slice %350 {offsets = [0, 0], sizes = [8, 96], strides = [1, 1]} : vector<8x128xf32> to vector<8x96xf32>
    %352 = arith.negf %351 : vector<8x96xf32>
    %353 = math.exp %352 : vector<8x96xf32>
    %cst_113 = arith.constant 1.000000e+00 : f32
    %354 = vector.broadcast %cst_113 : f32 to vector<8x96xf32>
    %355 = arith.addf %354, %353 : vector<8x96xf32>
    %356 = arith.divf %354, %355 : vector<8x96xf32>
    %357 = vector.extract_strided_slice %350 {offsets = [0, 96], sizes = [8, 32], strides = [1, 1]} : vector<8x128xf32> to vector<8x32xf32>
    %358 = math.tanh %357 : vector<8x32xf32>
    %359 = vector.extract_strided_slice %356 {offsets = [0, 0], sizes = [8, 32], strides = [1, 1]} : vector<8x96xf32> to vector<8x32xf32>
    %360 = vector.extract_strided_slice %356 {offsets = [0, 32], sizes = [8, 32], strides = [1, 1]} : vector<8x96xf32> to vector<8x32xf32>
    %361 = vector.extract_strided_slice %356 {offsets = [0, 64], sizes = [8, 32], strides = [1, 1]} : vector<8x96xf32> to vector<8x32xf32>
    %362 = arith.mulf %360, %340 : vector<8x32xf32>
    %363 = arith.mulf %359, %358 : vector<8x32xf32>
    %364 = arith.addf %362, %363 : vector<8x32xf32>
    %365 = math.tanh %364 : vector<8x32xf32>
    %366 = arith.mulf %361, %365 : vector<8x32xf32>
    %367 = arith.index_cast %346 : i32 to index
    %c0_114 = arith.constant 0 : index
    %368 = vector.load %arg8[%367, %c0_114] : memref<64x32xf32, #tpu.memory_space<vmem>>, vector<8x32xf32>
    tpu.vector_store %arg8[%367, %c0_114], %366 {strides = array<i32>} : memref<64x32xf32, #tpu.memory_space<vmem>>, vector<8x32xf32>,
    %c6_i32_115 = arith.constant 6 : i32
    %c8_i32_116 = arith.constant 8 : i32
    %369 = arith.muli %c6_i32_115, %c8_i32_116 : i32
    %370 = tpu.assume_multiple %369, 8 : i32
    %371 = arith.index_cast %370 : i32 to index
    %c0_117 = arith.constant 0 : index
    %372 = vector.load %arg9[%371, %c0_117] : memref<64x128xf32, #tpu.memory_space<vmem>>, vector<8x128xf32>
    %cst_118 = arith.constant dense<0.000000e+00> : vector<8x128xf32>
    %373 = tpu.matmul %366, %220, %cst_118 {dimension_numbers = #tpu.dot_dimension_numbers<[1], [0], [0], [1], [0, 0, 1, 1], [], []>} : vector<8x32xf32>, vector<32x128xf32>, vector<8x128xf32> -> vector<8x128xf32>
    %374 = arith.addf %372, %373 : vector<8x128xf32>
    %375 = vector.extract_strided_slice %374 {offsets = [0, 0], sizes = [8, 96], strides = [1, 1]} : vector<8x128xf32> to vector<8x96xf32>
    %376 = arith.negf %375 : vector<8x96xf32>
    %377 = math.exp %376 : vector<8x96xf32>
    %cst_119 = arith.constant 1.000000e+00 : f32
    %378 = vector.broadcast %cst_119 : f32 to vector<8x96xf32>
    %379 = arith.addf %378, %377 : vector<8x96xf32>
    %380 = arith.divf %378, %379 : vector<8x96xf32>
    %381 = vector.extract_strided_slice %374 {offsets = [0, 96], sizes = [8, 32], strides = [1, 1]} : vector<8x128xf32> to vector<8x32xf32>
    %382 = math.tanh %381 : vector<8x32xf32>
    %383 = vector.extract_strided_slice %380 {offsets = [0, 0], sizes = [8, 32], strides = [1, 1]} : vector<8x96xf32> to vector<8x32xf32>
    %384 = vector.extract_strided_slice %380 {offsets = [0, 32], sizes = [8, 32], strides = [1, 1]} : vector<8x96xf32> to vector<8x32xf32>
    %385 = vector.extract_strided_slice %380 {offsets = [0, 64], sizes = [8, 32], strides = [1, 1]} : vector<8x96xf32> to vector<8x32xf32>
    %386 = arith.mulf %384, %364 : vector<8x32xf32>
    %387 = arith.mulf %383, %382 : vector<8x32xf32>
    %388 = arith.addf %386, %387 : vector<8x32xf32>
    %389 = math.tanh %388 : vector<8x32xf32>
    %390 = arith.mulf %385, %389 : vector<8x32xf32>
    %391 = arith.index_cast %370 : i32 to index
    %c0_120 = arith.constant 0 : index
    %392 = vector.load %arg8[%391, %c0_120] : memref<64x32xf32, #tpu.memory_space<vmem>>, vector<8x32xf32>
    tpu.vector_store %arg8[%391, %c0_120], %390 {strides = array<i32>} : memref<64x32xf32, #tpu.memory_space<vmem>>, vector<8x32xf32>,
    %c7_i32_121 = arith.constant 7 : i32
    %c8_i32_122 = arith.constant 8 : i32
    %393 = arith.muli %c7_i32_121, %c8_i32_122 : i32
    %394 = tpu.assume_multiple %393, 8 : i32
    %395 = arith.index_cast %394 : i32 to index
    %c0_123 = arith.constant 0 : index
    %396 = vector.load %arg9[%395, %c0_123] : memref<64x128xf32, #tpu.memory_space<vmem>>, vector<8x128xf32>
    %cst_124 = arith.constant dense<0.000000e+00> : vector<8x128xf32>
    %397 = tpu.matmul %390, %220, %cst_124 {dimension_numbers = #tpu.dot_dimension_numbers<[1], [0], [0], [1], [0, 0, 1, 1], [], []>} : vector<8x32xf32>, vector<32x128xf32>, vector<8x128xf32> -> vector<8x128xf32>
    %398 = arith.addf %396, %397 : vector<8x128xf32>
    %399 = vector.extract_strided_slice %398 {offsets = [0, 0], sizes = [8, 96], strides = [1, 1]} : vector<8x128xf32> to vector<8x96xf32>
    %400 = arith.negf %399 : vector<8x96xf32>
    %401 = math.exp %400 : vector<8x96xf32>
    %cst_125 = arith.constant 1.000000e+00 : f32
    %402 = vector.broadcast %cst_125 : f32 to vector<8x96xf32>
    %403 = arith.addf %402, %401 : vector<8x96xf32>
    %404 = arith.divf %402, %403 : vector<8x96xf32>
    %405 = vector.extract_strided_slice %398 {offsets = [0, 96], sizes = [8, 32], strides = [1, 1]} : vector<8x128xf32> to vector<8x32xf32>
    %406 = math.tanh %405 : vector<8x32xf32>
    %407 = vector.extract_strided_slice %404 {offsets = [0, 0], sizes = [8, 32], strides = [1, 1]} : vector<8x96xf32> to vector<8x32xf32>
    %408 = vector.extract_strided_slice %404 {offsets = [0, 32], sizes = [8, 32], strides = [1, 1]} : vector<8x96xf32> to vector<8x32xf32>
    %409 = vector.extract_strided_slice %404 {offsets = [0, 64], sizes = [8, 32], strides = [1, 1]} : vector<8x96xf32> to vector<8x32xf32>
    %410 = arith.mulf %408, %388 : vector<8x32xf32>
    %411 = arith.mulf %407, %406 : vector<8x32xf32>
    %412 = arith.addf %410, %411 : vector<8x32xf32>
    %413 = math.tanh %412 : vector<8x32xf32>
    %414 = arith.mulf %409, %413 : vector<8x32xf32>
    %415 = arith.index_cast %394 : i32 to index
    %c0_126 = arith.constant 0 : index
    %416 = vector.load %arg8[%415, %c0_126] : memref<64x32xf32, #tpu.memory_space<vmem>>, vector<8x32xf32>
    tpu.vector_store %arg8[%415, %c0_126], %414 {strides = array<i32>} : memref<64x32xf32, #tpu.memory_space<vmem>>, vector<8x32xf32>,
    %c8_i32_127 = arith.constant 8 : i32
    %c1_128 = arith.constant 1 : index
    %c0_129 = arith.constant 0 : index
    %c0_130 = arith.constant 0 : index
    %417 = vector.load %arg11[%c1_128, %c0_129, %c0_130] : memref<2x8x32xf32, #tpu.memory_space<vmem>>, vector<1x8x32xf32>
    %418 = vector.shape_cast %417 : vector<1x8x32xf32> to vector<8x32xf32>
    %419 = vector.shape_cast %414 : vector<8x32xf32> to vector<1x8x32xf32>
    tpu.vector_store %arg11[%c1_128, %c0_129, %c0_130], %419 {strides = array<i32>} : memref<2x8x32xf32, #tpu.memory_space<vmem>>, vector<1x8x32xf32>,
    %c1_131 = arith.constant 1 : index
    %c0_132 = arith.constant 0 : index
    %c0_133 = arith.constant 0 : index
    %420 = vector.load %arg12[%c1_131, %c0_132, %c0_133] : memref<2x8x32xf32, #tpu.memory_space<vmem>>, vector<1x8x32xf32>
    %421 = vector.shape_cast %420 : vector<1x8x32xf32> to vector<8x32xf32>
    %422 = vector.shape_cast %412 : vector<8x32xf32> to vector<1x8x32xf32>
    tpu.vector_store %arg12[%c1_131, %c0_132, %c0_133], %422 {strides = array<i32>} : memref<2x8x32xf32, #tpu.memory_space<vmem>>, vector<1x8x32xf32>,
    return
  }
  func.func @transform_0(%arg0: i32) -> (i32, i32) {
    %c0_i32 = arith.constant 0 : i32
    %c0_i32_0 = arith.constant 0 : i32
    return %arg0, %c0_i32 : i32, i32
  }
  func.func @transform_1(%arg0: i32) -> (i32, i32) {
    %c0_i32 = arith.constant 0 : i32
    %c0_i32_0 = arith.constant 0 : i32
    %c0_i32_1 = arith.constant 0 : i32
    return %c0_i32, %c0_i32_0 : i32, i32
  }
  func.func @transform_2(%arg0: i32) -> (i32, i32) {
    %c0_i32 = arith.constant 0 : i32
    %c0_i32_0 = arith.constant 0 : i32
    %c0_i32_1 = arith.constant 0 : i32
    return %c0_i32, %c0_i32_0 : i32, i32
  }
  func.func @transform_3(%arg0: i32) -> (i32, i32) {
    %c0_i32 = arith.constant 0 : i32
    %c0_i32_0 = arith.constant 0 : i32
    %c0_i32_1 = arith.constant 0 : i32
    return %c0_i32, %c0_i32_0 : i32, i32
  }
  func.func @transform_4(%arg0: i32) -> (i32, i32) {
    %c0_i32 = arith.constant 0 : i32
    %c0_i32_0 = arith.constant 0 : i32
    %c0_i32_1 = arith.constant 0 : i32
    return %c0_i32, %c0_i32_0 : i32, i32
  }
  func.func @transform_5(%arg0: i32) -> (i32, i32) {
    %c0_i32 = arith.constant 0 : i32
    %c0_i32_0 = arith.constant 0 : i32
    %c0_i32_1 = arith.constant 0 : i32
    return %c0_i32, %c0_i32_0 : i32, i32
  }
  func.func @transform_6(%arg0: i32) -> (i32, i32) {
    %c0_i32 = arith.constant 0 : i32
    %c0_i32_0 = arith.constant 0 : i32
    %c0_i32_1 = arith.constant 0 : i32
    return %c0_i32, %c0_i32_0 : i32, i32
  }
  func.func @transform_7(%arg0: i32) -> (i32, i32) {
    %c0_i32 = arith.constant 0 : i32
    %c0_i32_0 = arith.constant 0 : i32
    return %arg0, %c0_i32 : i32, i32
  }
}

</mosaic_0001>

<llo_original>
// kernel: tpu_custom_call.1
$region0: #{tpu_custom_call.1}
  #allocation0 [shape = 'u32[]', space=smem, size = 0x4, offset = 0x4, fixed_abs, tag = 'smem constant byte address 0x4 - core index']
  #allocation1 [shape = 'u32[144,128]{1,0:T(1,128)}', space=vmem, size = 0x12000, scoped, tag = 'internal scratch']
  #allocation2 [shape = 'f32[64,128]{1,0:T(8,128)}', space=vmem, size = 0x8000, scoped, tag = 'scratch operand']
  #allocation3 [shape = 'f32[64,32]{1,0:T(8,128)}', space=vmem, size = 0x8000, scoped, tag = 'scratch operand']
  #allocation4 [shape = 'f32[2,8,32]{2,1,0:T(8,128)}', space=vmem, size = 0x2000, scoped, tag = 'scratch operand']
  #allocation5 [shape = 'f32[2,8,32]{2,1,0:T(8,128)}', space=vmem, size = 0x2000, scoped, tag = 'scratch operand']
  %s0 = inlined_call_operand.vmem [shape: f32[64,32], index: 0, kind: input, shape index: {}]
  %s1 = inlined_call_operand.vmem [shape: f32[32,128], index: 1, kind: input, shape index: {}]
  %s2 = inlined_call_operand.vmem [shape: f32[32,128], index: 2, kind: input, shape index: {}]
  %s3 = inlined_call_operand.vmem [shape: f32[1,128], index: 3, kind: input, shape index: {}]
  %s4 = inlined_call_operand.vmem [shape: f32[32,128], index: 4, kind: input, shape index: {}]
  %s5 = inlined_call_operand.hbm [shape: f32[32,128], index: 5, kind: input, shape index: {}]
  %s6 = inlined_call_operand.vmem [shape: f32[1,128], index: 6, kind: input, shape index: {}]
  %s7 = inlined_call_operand.vmem [shape: f32[64,32], index: 7, kind: output, shape index: {}]
  %s8 = sld [smem:[#allocation0]]
  $region46: #{tpu_custom_call.1} parent=0
    _
  %s10 = ssub.s32 1, %s8
  %s11 = scalar_select 0, %s10, %s8
  $region1: #{tpu_custom_call.1} parent=0
    #allocation6 [shape = 'u8[16384]{0}', space=vmem, size = 0x4000, scoped, tag = 'input window, operand 5, single buffered']
    #allocation7 [shape = 's32[1]{0}', space=sflag, size = 0x4, scoped, tag = 'scoped memory for tpu_custom_call.1']
    %12 = vsyncpa [#allocation7], 0
    // Predicated region
    $region2: #{tpu_custom_call.1} parent=1 // pred_check
      _
    $region3: #{tpu_custom_call.1} parent=1 // pred_check_branch
      %14 = sbr.rel (0) target = $region5
    $region4: #{tpu_custom_call.1} parent=1 // pred_region
      _
    $region5: #{tpu_custom_call.1} parent=1 // pred_fallthru
      _
    // Predicated region
    $region6: #{tpu_custom_call.1} parent=1 // pred_check
      _
    $region7: #{tpu_custom_call.1} parent=1 // pred_check_branch
      %16 = sbr.rel (0) target = $region9
    $region8: #{tpu_custom_call.1} parent=1 // pred_region
      _
    $region9: #{tpu_custom_call.1} parent=1 // pred_fallthru
      _
    // Predicated region
    $region10: #{tpu_custom_call.1} parent=1 // pred_check
      _
    $region11: #{tpu_custom_call.1} parent=1 // pred_check_branch
      %18 = sbr.rel (0) target = $region13
    $region12: #{tpu_custom_call.1} parent=1 // pred_region
      _
    $region13: #{tpu_custom_call.1} parent=1 // pred_fallthru
      _
    // Predicated region
    $region14: #{tpu_custom_call.1} parent=1 // pred_check
      _
    $region15: #{tpu_custom_call.1} parent=1 // pred_check_branch
      %20 = sbr.rel (0) target = $region17
    $region16: #{tpu_custom_call.1} parent=1 // pred_region
      _
    $region17: #{tpu_custom_call.1} parent=1 // pred_fallthru
      _
    // Predicated region
    $region18: #{tpu_custom_call.1} parent=1 // pred_check
      _
    $region19: #{tpu_custom_call.1} parent=1 // pred_check_branch
      %22 = sbr.rel (0) target = $region21
    $region20: #{tpu_custom_call.1} parent=1 // pred_region
      _
    $region21: #{tpu_custom_call.1} parent=1 // pred_fallthru
      _
    // Predicated region
    $region22: #{tpu_custom_call.1} parent=1 // pred_check
      _
    $region23: #{tpu_custom_call.1} parent=1 // pred_check_branch
      %24 = sbr.rel (0) target = $region25
    $region24: #{tpu_custom_call.1} parent=1 // pred_region
      %s26 = ssub.s32 512, 512
      %27 = vsyncadd [#allocation7], %s26
      %s28 = sshll.u32 [#allocation6], 4
      %s29 = int_to_ptr.vmem [resolvable:$true] %s28
      %34 = dma.hbm_to_vmem [thread:$0]  %s5, 512, %s29, [#allocation7], 128, 128, 8
    $region25: #{tpu_custom_call.1} parent=1 // pred_fallthru
      _
    // Predicated region
    $region26: #{tpu_custom_call.1} parent=1 // pred_check
      _
    $region27: #{tpu_custom_call.1} parent=1 // pred_check_branch
      %36 = sbr.rel (0) target = $region29
    $region28: #{tpu_custom_call.1} parent=1 // pred_region
      _
    $region29: #{tpu_custom_call.1} parent=1 // pred_fallthru
      _
    // Predicated region
    $region30: #{tpu_custom_call.1} parent=1 // pred_check
      _
    $region31: #{tpu_custom_call.1} parent=1 // pred_check_branch
      %38 = sbr.rel (0) target = $region33
    $region32: #{tpu_custom_call.1} parent=1 // pred_region
      %39 = dma.done [#allocation7], 512
    $region33: #{tpu_custom_call.1} parent=1 // pred_fallthru
      _
    %p40 = scmp.eq.s32.totalorder 0, 0
    // Predicated region
    $region34: #{tpu_custom_call.1} parent=1 // pred_check
      %p41 = pneg %p40
    $region35: #{tpu_custom_call.1} parent=1 // pred_check_branch
      %43 = sbr.rel (%p41) target = $region37
    $region36: #{tpu_custom_call.1} parent=1 // pred_region
      %vm44 = vcmask 261120
      %45 = vst.msk [vmem:[#allocation4] sm:$0xff] %vm44, 0.0
      %46 = vst.msk [vmem:[#allocation4 + $0x8] sm:$0xff] %vm44, 0.0
      %47 = vst.msk [vmem:[#allocation5] sm:$0xff] %vm44, 0.0
      %48 = vst.msk [vmem:[#allocation5 + $0x8] sm:$0xff] %vm44, 0.0
    $region37: #{tpu_custom_call.1} parent=1 // pred_fallthru
      _
    %v49 = vld [vmem:[%s0] sm:$0xff]
    %v50 = vld [vmem:[%s0 + $0x8] sm:$0xff]
    %v51 = vld [vmem:[%s0 + $0x10] sm:$0xff]
    %v52 = vld [vmem:[%s0 + $0x18] sm:$0xff]
    %v53 = vld [vmem:[%s0 + $0x20] sm:$0xff]
    %v54 = vld [vmem:[%s0 + $0x28] sm:$0xff]
    %v55 = vld [vmem:[%s0 + $0x30] sm:$0xff]
    %v56 = vld [vmem:[%s0 + $0x38] sm:$0xff]
    %v57 = vld [vmem:[%s1] sm:$0xff]
    %v58 = vld [vmem:[%s1 + $0x8] sm:$0xff]
    %v59 = vld [vmem:[%s1 + $0x10] sm:$0xff]
    %v60 = vld [vmem:[%s1 + $0x18] sm:$0xff]
    %v61 = vld [vmem:[%s3] sm:$0x1]
    %v63 = vlaneseq
    %v64 = vshrl.u32 %v63, 7
    %v65 = vsub.s32 0, %v64
    %v66 = vrot.slane %v61, %v65
    %vm68 = vcmask 261120
    %v70 = vsel %vm68, %v49, 0
    %v73 = vsel %vm68, %v50, 0
    %v76 = vsel %vm68, %v51, 0
    %v79 = vsel %vm68, %v52, 0
    %v82 = vsel %vm68, %v53, 0
    %v85 = vsel %vm68, %v54, 0
    %v88 = vsel %vm68, %v55, 0
    %v91 = vsel %vm68, %v56, 0
    %93 = vmatprep.subr.mxu0 0.0
    %94 = vmatpush1.msra.mxu0 %v57
    %95 = vmatprep.subr.mxu0 0.0
    %96 = vmatpush1.msra.mxu0 %v58
    %97 = vmatprep.subr.mxu0 0.0
    %98 = vmatpush1.msra.mxu0 %v59
    %99 = vmatprep.subr.mxu0 0.0
    %100 = vmatpush1.msra.mxu0 %v60
    %101 = vmatprep.subr.mxu0 0.0
    %102 = vmatpush1.msra.mxu0 0.0
    %103 = vmatprep.subr.mxu0 0.0
    %104 = vmatpush1.msra.mxu0 0.0
    %105 = vmatprep.subr.mxu0 0.0
    %106 = vmatpush1.msra.mxu0 0.0
    %107 = vmatprep.subr.mxu0 0.0
    %108 = vmatpush1.msra.mxu0 0.0
    %109 = vmatprep.subr.mxu0 0.0
    %110 = vmatpush1.msra.mxu0 0.0
    %111 = vmatprep.subr.mxu0 0.0
    %112 = vmatpush1.msra.mxu0 0.0
    %113 = vmatprep.subr.mxu0 0.0
    %114 = vmatpush1.msra.mxu0 0.0
    %115 = vmatprep.subr.mxu0 0.0
    %116 = vmatpush1.msra.mxu0 0.0
    %117 = vmatprep.subr.mxu0 0.0
    %118 = vmatpush1.msra.mxu0 0.0
    %119 = vmatprep.subr.mxu0 0.0
    %120 = vmatpush1.msra.mxu0 0.0
    %121 = vmatprep.subr.mxu0 0.0
    %122 = vmatpush1.msra.mxu0 0.0
    %123 = vmatprep.subr.mxu0 0.0
    %124 = vmatpush1.msra.mxu0 0.0
    %125 = vmatprep.subr.mxu0 0.0
    %126 = vmatpush1.msra.mxu0 0.0
    %127 = vmatprep.subr.mxu0 0.0
    %128 = vmatpush1.msra.mxu0 0.0
    %129 = vmatprep.subr.mxu0 0.0
    %130 = vmatpush1.msra.mxu0 0.0
    %131 = vmatprep.subr.mxu0 0.0
    %132 = vmatpush1.msra.mxu0 0.0
    %133 = vmatprep.subr.mxu0 0.0
    %134 = vmatpush1.msra.mxu0 0.0
    %135 = vmatprep.subr.mxu0 0.0
    %136 = vmatpush1.msra.mxu0 0.0
    %137 = vmatprep.subr.mxu0 0.0
    %138 = vmatpush1.msra.mxu0 0.0
    %139 = vmatprep.subr.mxu0 0.0
    %140 = vmatpush1.msra.mxu0 0.0
    %141 = vmatprep.subr.mxu0 0.0
    %142 = vmatpush1.msra.mxu0 0.0
    %143 = vmatprep.subr.mxu0 0.0
    %144 = vmatpush1.msra.mxu0 0.0
    %145 = vmatprep.subr.mxu0 0.0
    %146 = vmatpush1.msra.mxu0 0.0
    %147 = vmatprep.subr.mxu0 0.0
    %148 = vmatpush1.msra.mxu0 0.0
    %149 = vmatprep.subr.mxu0 0.0
    %150 = vmatpush1.msra.mxu0 0.0
    %151 = vmatprep.subr.mxu0 0.0
    %152 = vmatpush1.msra.mxu0 0.0
    %153 = vmatprep.subr.mxu0 0.0
    %154 = vmatpush1.msra.mxu0 0.0
    %155 = vmatprep.subr.mxu0 0.0
    %156 = vmatpush1.msra.mxu0 0.0
    %157 = vmatprep.mubr.f32.mxu0 0.0
    %158 = vmatmul.mubr.f32.gmra.mrb[0].mxu0 %v70
    %v159 = vpop.f32.mrb[0].mxu0
    %v160 = vadd.f32 %v66, %v159
    %v161 = vpop.f32.mrb[0].mxu0
    %162 = vmatprep.mubr.f32.mxu0 0.0
    %163 = vmatmul.mubr.f32.gmra.mrb[0].mxu0 %v73
    %v164 = vpop.f32.mrb[0].mxu0
    %v165 = vadd.f32 %v66, %v164
    %v166 = vpop.f32.mrb[0].mxu0
    %167 = vmatprep.mubr.f32.mxu0 0.0
    %168 = vmatmul.mubr.f32.gmra.mrb[0].mxu0 %v76
    %v169 = vpop.f32.mrb[0].mxu0
    %v170 = vadd.f32 %v66, %v169
    %v171 = vpop.f32.mrb[0].mxu0
    %172 = vmatprep.mubr.f32.mxu0 0.0
    %173 = vmatmul.mubr.f32.gmra.mrb[0].mxu0 %v79
    %v174 = vpop.f32.mrb[0].mxu0
    %v175 = vadd.f32 %v66, %v174
    %v176 = vpop.f32.mrb[0].mxu0
    %177 = vmatprep.mubr.f32.mxu0 0.0
    %178 = vmatmul.mubr.f32.gmra.mrb[0].mxu0 %v82
    %v179 = vpop.f32.mrb[0].mxu0
    %v180 = vadd.f32 %v66, %v179
    %v181 = vpop.f32.mrb[0].mxu0
    %182 = vmatprep.mubr.f32.mxu0 0.0
    %183 = vmatmul.mubr.f32.gmra.mrb[0].mxu0 %v85
    %v184 = vpop.f32.mrb[0].mxu0
    %v185 = vadd.f32 %v66, %v184
    %v186 = vpop.f32.mrb[0].mxu0
    %187 = vmatprep.mubr.f32.mxu0 0.0
    %188 = vmatmul.mubr.f32.gmra.mrb[0].mxu0 %v88
    %v189 = vpop.f32.mrb[0].mxu0
    %v190 = vadd.f32 %v66, %v189
    %v191 = vpop.f32.mrb[0].mxu0
    %192 = vmatprep.mubr.f32.mxu0 0.0
    %193 = vmatmul.mubr.f32.gmra.mrb[0].mxu0 %v91
    %v194 = vpop.f32.mrb[0].mxu0
    %v195 = vadd.f32 %v66, %v194
    %v196 = vpop.f32.mrb[0].mxu0
    %197 = vdwg.mxu0
    %198 = vst [vmem:[#allocation2] sm:$0xff] %v160
    %199 = vst [vmem:[#allocation2 + $0x8] sm:$0xff] %v165
    %200 = vst [vmem:[#allocation2 + $0x10] sm:$0xff] %v170
    %201 = vst [vmem:[#allocation2 + $0x18] sm:$0xff] %v175
    %202 = vst [vmem:[#allocation2 + $0x20] sm:$0xff] %v180
    %203 = vst [vmem:[#allocation2 + $0x28] sm:$0xff] %v185
    %204 = vst [vmem:[#allocation2 + $0x30] sm:$0xff] %v190
    %205 = vst [vmem:[#allocation2 + $0x38] sm:$0xff] %v195
    %v206 = vld [vmem:[%s2] sm:$0xff]
    %v207 = vld [vmem:[%s2 + $0x8] sm:$0xff]
    %v208 = vld [vmem:[%s2 + $0x10] sm:$0xff]
    %v209 = vld [vmem:[%s2 + $0x18] sm:$0xff]
    %v210 = vld [vmem:[#allocation4] sm:$0xff]
    %v211 = vld [vmem:[#allocation5] sm:$0xff]
    %v212 = vld [vmem:[#allocation2] sm:$0xff]
    %v214 = vsel %vm68, %v210, 0
    %216 = vmatprep.subr.mxu0 0.0
    %217 = vmatpush1.msra.mxu0 %v206
    %218 = vmatprep.subr.mxu0 0.0
    %219 = vmatpush1.msra.mxu0 %v207
    %220 = vmatprep.subr.mxu0 0.0
    %221 = vmatpush1.msra.mxu0 %v208
    %222 = vmatprep.subr.mxu0 0.0
    %223 = vmatpush1.msra.mxu0 %v209
    %224 = vmatprep.subr.mxu0 0.0
    %225 = vmatpush1.msra.mxu0 0.0
    %226 = vmatprep.subr.mxu0 0.0
    %227 = vmatpush1.msra.mxu0 0.0
    %228 = vmatprep.subr.mxu0 0.0
    %229 = vmatpush1.msra.mxu0 0.0
    %230 = vmatprep.subr.mxu0 0.0
    %231 = vmatpush1.msra.mxu0 0.0
    %232 = vmatprep.subr.mxu0 0.0
    %233 = vmatpush1.msra.mxu0 0.0
    %234 = vmatprep.subr.mxu0 0.0
    %235 = vmatpush1.msra.mxu0 0.0
    %236 = vmatprep.subr.mxu0 0.0
    %237 = vmatpush1.msra.mxu0 0.0
    %238 = vmatprep.subr.mxu0 0.0
    %239 = vmatpush1.msra.mxu0 0.0
    %240 = vmatprep.subr.mxu0 0.0
    %241 = vmatpush1.msra.mxu0 0.0
    %242 = vmatprep.subr.mxu0 0.0
    %243 = vmatpush1.msra.mxu0 0.0
    %244 = vmatprep.subr.mxu0 0.0
    %245 = vmatpush1.msra.mxu0 0.0
    %246 = vmatprep.subr.mxu0 0.0
    %247 = vmatpush1.msra.mxu0 0.0
    %248 = vmatprep.subr.mxu0 0.0
    %249 = vmatpush1.msra.mxu0 0.0
    %250 = vmatprep.subr.mxu0 0.0
    %251 = vmatpush1.msra.mxu0 0.0
    %252 = vmatprep.subr.mxu0 0.0
    %253 = vmatpush1.msra.mxu0 0.0
    %254 = vmatprep.subr.mxu0 0.0
    %255 = vmatpush1.msra.mxu0 0.0
    %256 = vmatprep.subr.mxu0 0.0
    %257 = vmatpush1.msra.mxu0 0.0
    %258 = vmatprep.subr.mxu0 0.0
    %259 = vmatpush1.msra.mxu0 0.0
    %260 = vmatprep.subr.mxu0 0.0
    %261 = vmatpush1.msra.mxu0 0.0
    %262 = vmatprep.subr.mxu0 0.0
    %263 = vmatpush1.msra.mxu0 0.0
    %264 = vmatprep.subr.mxu0 0.0
    %265 = vmatpush1.msra.mxu0 0.0
    %266 = vmatprep.subr.mxu0 0.0
    %267 = vmatpush1.msra.mxu0 0.0
    %268 = vmatprep.subr.mxu0 0.0
    %269 = vmatpush1.msra.mxu0 0.0
    %270 = vmatprep.subr.mxu0 0.0
    %271 = vmatpush1.msra.mxu0 0.0
    %272 = vmatprep.subr.mxu0 0.0
    %273 = vmatpush1.msra.mxu0 0.0
    %274 = vmatprep.subr.mxu0 0.0
    %275 = vmatpush1.msra.mxu0 0.0
    %276 = vmatprep.subr.mxu0 0.0
    %277 = vmatpush1.msra.mxu0 0.0
    %278 = vmatprep.subr.mxu0 0.0
    %279 = vmatpush1.msra.mxu0 0.0
    %280 = vmatprep.mubr.f32.mxu0 0.0
    %281 = vmatmul.mubr.f32.gmra.mrb[0].mxu0 %v214
    %v282 = vpop.f32.mrb[0].mxu0
    %v283 = vadd.f32 0.0, %v282
    %v284 = vpop.f32.mrb[0].mxu0
    %285 = vdwg.mxu0
    %v286 = vadd.f32 %v212, %v283
    %v287 = vxor.u32 %v286, 2147483648
    %v288 = vmul.f32 %v287, 1.442695
    %v289 = vpow.pop %v288
    %v290 = vadd.f32 %v289, 1.0
    %v291 = vrcp.pop %v290
    %v292 = vmul.f32 1.0, %v291
    %v293 = vtanh.pop %v286
    %295 = vrot.lane.b32.xlu0 %v211, 32
    %v296 = vpop.permute.xlu0 %295
    %v298 = vmul.f32 %v292, %v296
    %300 = vrot.lane.b32.xlu0 %v293, 32
    %v301 = vpop.permute.xlu0 %300
    %v303 = vmul.f32 %v292, %v301
    %305 = vrot.lane.b32.xlu0 %v303, 32
    %v306 = vpop.permute.xlu0 %305
    %v308 = vadd.f32 %v298, %v306
    %v309 = vtanh.pop %v308
    %311 = vrot.lane.b32.xlu0 %v309, 32
    %v312 = vpop.permute.xlu0 %311
    %v314 = vmul.f32 %v292, %v312
    %316 = vrot.lane.b32.xlu0 %v314, 64
    %v317 = vpop.permute.xlu0 %316
    %319 = vst.msk [vmem:[#allocation3] sm:$0xff] %vm68, %v317
    %s320 = scalar_lea.vmem [#allocation2], 8
    %v321 = vld [vmem:[%s320] sm:$0xff]
    %v322 = vsel %vm68, %v317, 0
    %324 = vmatprep.subr.mxu0 0.0
    %325 = vmatpush1.msra.mxu0 %v206
    %326 = vmatprep.subr.mxu0 0.0
    %327 = vmatpush1.msra.mxu0 %v207
    %328 = vmatprep.subr.mxu0 0.0
    %329 = vmatpush1.msra.mxu0 %v208
    %330 = vmatprep.subr.mxu0 0.0
    %331 = vmatpush1.msra.mxu0 %v209
    %332 = vmatprep.subr.mxu0 0.0
    %333 = vmatpush1.msra.mxu0 0.0
    %334 = vmatprep.subr.mxu0 0.0
    %335 = vmatpush1.msra.mxu0 0.0
    %336 = vmatprep.subr.mxu0 0.0
    %337 = vmatpush1.msra.mxu0 0.0
    %338 = vmatprep.subr.mxu0 0.0
    %339 = vmatpush1.msra.mxu0 0.0
    %340 = vmatprep.subr.mxu0 0.0
    %341 = vmatpush1.msra.mxu0 0.0
    %342 = vmatprep.subr.mxu0 0.0
    %343 = vmatpush1.msra.mxu0 0.0
    %344 = vmatprep.subr.mxu0 0.0
    %345 = vmatpush1.msra.mxu0 0.0
    %346 = vmatprep.subr.mxu0 0.0
    %347 = vmatpush1.msra.mxu0 0.0
    %348 = vmatprep.subr.mxu0 0.0
    %349 = vmatpush1.msra.mxu0 0.0
    %350 = vmatprep.subr.mxu0 0.0
    %351 = vmatpush1.msra.mxu0 0.0
    %352 = vmatprep.subr.mxu0 0.0
    %353 = vmatpush1.msra.mxu0 0.0
    %354 = vmatprep.subr.mxu0 0.0
    %355 = vmatpush1.msra.mxu0 0.0
    %356 = vmatprep.subr.mxu0 0.0
    %357 = vmatpush1.msra.mxu0 0.0
    %358 = vmatprep.subr.mxu0 0.0
    %359 = vmatpush1.msra.mxu0 0.0
    %360 = vmatprep.subr.mxu0 0.0
    %361 = vmatpush1.msra.mxu0 0.0
    %362 = vmatprep.subr.mxu0 0.0
    %363 = vmatpush1.msra.mxu0 0.0
    %364 = vmatprep.subr.mxu0 0.0
    %365 = vmatpush1.msra.mxu0 0.0
    %366 = vmatprep.subr.mxu0 0.0
    %367 = vmatpush1.msra.mxu0 0.0
    %368 = vmatprep.subr.mxu0 0.0
    %369 = vmatpush1.msra.mxu0 0.0
    %370 = vmatprep.subr.mxu0 0.0
    %371 = vmatpush1.msra.mxu0 0.0
    %372 = vmatprep.subr.mxu0 0.0
    %373 = vmatpush1.msra.mxu0 0.0
    %374 = vmatprep.subr.mxu0 0.0
    %375 = vmatpush1.msra.mxu0 0.0
    %376 = vmatprep.subr.mxu0 0.0
    %377 = vmatpush1.msra.mxu0 0.0
    %378 = vmatprep.subr.mxu0 0.0
    %379 = vmatpush1.msra.mxu0 0.0
    %380 = vmatprep.subr.mxu0 0.0
    %381 = vmatpush1.msra.mxu0 0.0
    %382 = vmatprep.subr.mxu0 0.0
    %383 = vmatpush1.msra.mxu0 0.0
    %384 = vmatprep.subr.mxu0 0.0
    %385 = vmatpush1.msra.mxu0 0.0
    %386 = vmatprep.subr.mxu0 0.0
    %387 = vmatpush1.msra.mxu0 0.0
    %388 = vmatprep.mubr.f32.mxu0 0.0
    %389 = vmatmul.mubr.f32.gmra.mrb[0].mxu0 %v322
    %v390 = vpop.f32.mrb[0].mxu0
    %v391 = vadd.f32 0.0, %v390
    %v392 = vpop.f32.mrb[0].mxu0
    %393 = vdwg.mxu0
    %v394 = vadd.f32 %v321, %v391
    %v395 = vxor.u32 %v394, 2147483648
    %v396 = vmul.f32 %v395, 1.442695
    %v397 = vpow.pop %v396
    %v398 = vadd.f32 %v397, 1.0
    %v399 = vrcp.pop %v398
    %v400 = vmul.f32 1.0, %v399
    %v401 = vtanh.pop %v394
    %v402 = vmul.f32 %v400, %v308
    %404 = vrot.lane.b32.xlu0 %v401, 32
    %v405 = vpop.permute.xlu0 %404
    %v407 = vmul.f32 %v400, %v405
    %409 = vrot.lane.b32.xlu0 %v407, 32
    %v410 = vpop.permute.xlu0 %409
    %v412 = vadd.f32 %v402, %v410
    %v413 = vtanh.pop %v412
    %415 = vrot.lane.b32.xlu0 %v413, 32
    %v416 = vpop.permute.xlu0 %415
    %v418 = vmul.f32 %v400, %v416
    %420 = vrot.lane.b32.xlu0 %v418, 64
    %v421 = vpop.permute.xlu0 %420
    %s423 = scalar_lea.vmem [#allocation3], 8
    %424 = vst.msk [vmem:[%s423] sm:$0xff] %vm68, %v421
    %s425 = scalar_lea.vmem [#allocation2], 16
    %v426 = vld [vmem:[%s425] sm:$0xff]
    %v427 = vsel %vm68, %v421, 0
    %429 = vmatprep.subr.mxu0 0.0
    %430 = vmatpush1.msra.mxu0 %v206
    %431 = vmatprep.subr.mxu0 0.0
    %432 = vmatpush1.msra.mxu0 %v207
    %433 = vmatprep.subr.mxu0 0.0
    %434 = vmatpush1.msra.mxu0 %v208
    %435 = vmatprep.subr.mxu0 0.0
    %436 = vmatpush1.msra.mxu0 %v209
    %437 = vmatprep.subr.mxu0 0.0
    %438 = vmatpush1.msra.mxu0 0.0
    %439 = vmatprep.subr.mxu0 0.0
    %440 = vmatpush1.msra.mxu0 0.0
    %441 = vmatprep.subr.mxu0 0.0
    %442 = vmatpush1.msra.mxu0 0.0
    %443 = vmatprep.subr.mxu0 0.0
    %444 = vmatpush1.msra.mxu0 0.0
    %445 = vmatprep.subr.mxu0 0.0
    %446 = vmatpush1.msra.mxu0 0.0
    %447 = vmatprep.subr.mxu0 0.0
    %448 = vmatpush1.msra.mxu0 0.0
    %449 = vmatprep.subr.mxu0 0.0
    %450 = vmatpush1.msra.mxu0 0.0
    %451 = vmatprep.subr.mxu0 0.0
    %452 = vmatpush1.msra.mxu0 0.0
    %453 = vmatprep.subr.mxu0 0.0
    %454 = vmatpush1.msra.mxu0 0.0
    %455 = vmatprep.subr.mxu0 0.0
    %456 = vmatpush1.msra.mxu0 0.0
    %457 = vmatprep.subr.mxu0 0.0
    %458 = vmatpush1.msra.mxu0 0.0
    %459 = vmatprep.subr.mxu0 0.0
    %460 = vmatpush1.msra.mxu0 0.0
    %461 = vmatprep.subr.mxu0 0.0
    %462 = vmatpush1.msra.mxu0 0.0
    %463 = vmatprep.subr.mxu0 0.0
    %464 = vmatpush1.msra.mxu0 0.0
    %465 = vmatprep.subr.mxu0 0.0
    %466 = vmatpush1.msra.mxu0 0.0
    %467 = vmatprep.subr.mxu0 0.0
    %468 = vmatpush1.msra.mxu0 0.0
    %469 = vmatprep.subr.mxu0 0.0
    %470 = vmatpush1.msra.mxu0 0.0
    %471 = vmatprep.subr.mxu0 0.0
    %472 = vmatpush1.msra.mxu0 0.0
    %473 = vmatprep.subr.mxu0 0.0
    %474 = vmatpush1.msra.mxu0 0.0
    %475 = vmatprep.subr.mxu0 0.0
    %476 = vmatpush1.msra.mxu0 0.0
    %477 = vmatprep.subr.mxu0 0.0
    %478 = vmatpush1.msra.mxu0 0.0
    %479 = vmatprep.subr.mxu0 0.0
    %480 = vmatpush1.msra.mxu0 0.0
    %481 = vmatprep.subr.mxu0 0.0
    %482 = vmatpush1.msra.mxu0 0.0
    %483 = vmatprep.subr.mxu0 0.0
    %484 = vmatpush1.msra.mxu0 0.0
    %485 = vmatprep.subr.mxu0 0.0
    %486 = vmatpush1.msra.mxu0 0.0
    %487 = vmatprep.subr.mxu0 0.0
    %488 = vmatpush1.msra.mxu0 0.0
    %489 = vmatprep.subr.mxu0 0.0
    %490 = vmatpush1.msra.mxu0 0.0
    %491 = vmatprep.subr.mxu0 0.0
    %492 = vmatpush1.msra.mxu0 0.0
    %493 = vmatprep.mubr.f32.mxu0 0.0
    %494 = vmatmul.mubr.f32.gmra.mrb[0].mxu0 %v427
    %v495 = vpop.f32.mrb[0].mxu0
    %v496 = vadd.f32 0.0, %v495
    %v497 = vpop.f32.mrb[0].mxu0
    %498 = vdwg.mxu0
    %v499 = vadd.f32 %v426, %v496
    %v500 = vxor.u32 %v499, 2147483648
    %v501 = vmul.f32 %v500, 1.442695
    %v502 = vpow.pop %v501
    %v503 = vadd.f32 %v502, 1.0
    %v504 = vrcp.pop %v503
    %v505 = vmul.f32 1.0, %v504
    %v506 = vtanh.pop %v499
    %v507 = vmul.f32 %v505, %v412
    %509 = vrot.lane.b32.xlu0 %v506, 32
    %v510 = vpop.permute.xlu0 %509
    %v512 = vmul.f32 %v505, %v510
    %514 = vrot.lane.b32.xlu0 %v512, 32
    %v515 = vpop.permute.xlu0 %514
    %v517 = vadd.f32 %v507, %v515
    %v518 = vtanh.pop %v517
    %520 = vrot.lane.b32.xlu0 %v518, 32
    %v521 = vpop.permute.xlu0 %520
    %v523 = vmul.f32 %v505, %v521
    %525 = vrot.lane.b32.xlu0 %v523, 64
    %v526 = vpop.permute.xlu0 %525
    %s528 = scalar_lea.vmem [#allocation3], 16
    %529 = vst.msk [vmem:[%s528] sm:$0xff] %vm68, %v526
    %s530 = scalar_lea.vmem [#allocation2], 24
    %v531 = vld [vmem:[%s530] sm:$0xff]
    %v532 = vsel %vm68, %v526, 0
    %534 = vmatprep.subr.mxu0 0.0
    %535 = vmatpush1.msra.mxu0 %v206
    %536 = vmatprep.subr.mxu0 0.0
    %537 = vmatpush1.msra.mxu0 %v207
    %538 = vmatprep.subr.mxu0 0.0
    %539 = vmatpush1.msra.mxu0 %v208
    %540 = vmatprep.subr.mxu0 0.0
    %541 = vmatpush1.msra.mxu0 %v209
    %542 = vmatprep.subr.mxu0 0.0
    %543 = vmatpush1.msra.mxu0 0.0
    %544 = vmatprep.subr.mxu0 0.0
    %545 = vmatpush1.msra.mxu0 0.0
    %546 = vmatprep.subr.mxu0 0.0
    %547 = vmatpush1.msra.mxu0 0.0
    %548 = vmatprep.subr.mxu0 0.0
    %549 = vmatpush1.msra.mxu0 0.0
    %550 = vmatprep.subr.mxu0 0.0
    %551 = vmatpush1.msra.mxu0 0.0
    %552 = vmatprep.subr.mxu0 0.0
    %553 = vmatpush1.msra.mxu0 0.0
    %554 = vmatprep.subr.mxu0 0.0
    %555 = vmatpush1.msra.mxu0 0.0
    %556 = vmatprep.subr.mxu0 0.0
    %557 = vmatpush1.msra.mxu0 0.0
    %558 = vmatprep.subr.mxu0 0.0
    %559 = vmatpush1.msra.mxu0 0.0
    %560 = vmatprep.subr.mxu0 0.0
    %561 = vmatpush1.msra.mxu0 0.0
    %562 = vmatprep.subr.mxu0 0.0
    %563 = vmatpush1.msra.mxu0 0.0
    %564 = vmatprep.subr.mxu0 0.0
    %565 = vmatpush1.msra.mxu0 0.0
    %566 = vmatprep.subr.mxu0 0.0
    %567 = vmatpush1.msra.mxu0 0.0
    %568 = vmatprep.subr.mxu0 0.0
    %569 = vmatpush1.msra.mxu0 0.0
    %570 = vmatprep.subr.mxu0 0.0
    %571 = vmatpush1.msra.mxu0 0.0
    %572 = vmatprep.subr.mxu0 0.0
    %573 = vmatpush1.msra.mxu0 0.0
    %574 = vmatprep.subr.mxu0 0.0
    %575 = vmatpush1.msra.mxu0 0.0
    %576 = vmatprep.subr.mxu0 0.0
    %577 = vmatpush1.msra.mxu0 0.0
    %578 = vmatprep.subr.mxu0 0.0
    %579 = vmatpush1.msra.mxu0 0.0
    %580 = vmatprep.subr.mxu0 0.0
    %581 = vmatpush1.msra.mxu0 0.0
    %582 = vmatprep.subr.mxu0 0.0
    %583 = vmatpush1.msra.mxu0 0.0
    %584 = vmatprep.subr.mxu0 0.0
    %585 = vmatpush1.msra.mxu0 0.0
    %586 = vmatprep.subr.mxu0 0.0
    %587 = vmatpush1.msra.mxu0 0.0
    %588 = vmatprep.subr.mxu0 0.0
    %589 = vmatpush1.msra.mxu0 0.0
    %590 = vmatprep.subr.mxu0 0.0
    %591 = vmatpush1.msra.mxu0 0.0
    %592 = vmatprep.subr.mxu0 0.0
    %593 = vmatpush1.msra.mxu0 0.0
    %594 = vmatprep.subr.mxu0 0.0
    %595 = vmatpush1.msra.mxu0 0.0
    %596 = vmatprep.subr.mxu0 0.0
    %597 = vmatpush1.msra.mxu0 0.0
    %598 = vmatprep.mubr.f32.mxu0 0.0
    %599 = vmatmul.mubr.f32.gmra.mrb[0].mxu0 %v532
    %v600 = vpop.f32.mrb[0].mxu0
    %v601 = vadd.f32 0.0, %v600
    %v602 = vpop.f32.mrb[0].mxu0
    %603 = vdwg.mxu0
    %v604 = vadd.f32 %v531, %v601
    %v605 = vxor.u32 %v604, 2147483648
    %v606 = vmul.f32 %v605, 1.442695
    %v607 = vpow.pop %v606
    %v608 = vadd.f32 %v607, 1.0
    %v609 = vrcp.pop %v608
    %v610 = vmul.f32 1.0, %v609
    %v611 = vtanh.pop %v604
    %v612 = vmul.f32 %v610, %v517
    %614 = vrot.lane.b32.xlu0 %v611, 32
    %v615 = vpop.permute.xlu0 %614
    %v617 = vmul.f32 %v610, %v615
    %619 = vrot.lane.b32.xlu0 %v617, 32
    %v620 = vpop.permute.xlu0 %619
    %v622 = vadd.f32 %v612, %v620
    %v623 = vtanh.pop %v622
    %625 = vrot.lane.b32.xlu0 %v623, 32
    %v626 = vpop.permute.xlu0 %625
    %v628 = vmul.f32 %v610, %v626
    %630 = vrot.lane.b32.xlu0 %v628, 64
    %v631 = vpop.permute.xlu0 %630
    %s633 = scalar_lea.vmem [#allocation3], 24
    %634 = vst.msk [vmem:[%s633] sm:$0xff] %vm68, %v631
    %s635 = scalar_lea.vmem [#allocation2], 32
    %v636 = vld [vmem:[%s635] sm:$0xff]
    %v637 = vsel %vm68, %v631, 0
    %639 = vmatprep.subr.mxu0 0.0
    %640 = vmatpush1.msra.mxu0 %v206
    %641 = vmatprep.subr.mxu0 0.0
    %642 = vmatpush1.msra.mxu0 %v207
    %643 = vmatprep.subr.mxu0 0.0
    %644 = vmatpush1.msra.mxu0 %v208
    %645 = vmatprep.subr.mxu0 0.0
    %646 = vmatpush1.msra.mxu0 %v209
    %647 = vmatprep.subr.mxu0 0.0
    %648 = vmatpush1.msra.mxu0 0.0
    %649 = vmatprep.subr.mxu0 0.0
    %650 = vmatpush1.msra.mxu0 0.0
    %651 = vmatprep.subr.mxu0 0.0
    %652 = vmatpush1.msra.mxu0 0.0
    %653 = vmatprep.subr.mxu0 0.0
    %654 = vmatpush1.msra.mxu0 0.0
    %655 = vmatprep.subr.mxu0 0.0
    %656 = vmatpush1.msra.mxu0 0.0
    %657 = vmatprep.subr.mxu0 0.0
    %658 = vmatpush1.msra.mxu0 0.0
    %659 = vmatprep.subr.mxu0 0.0
    %660 = vmatpush1.msra.mxu0 0.0
    %661 = vmatprep.subr.mxu0 0.0
    %662 = vmatpush1.msra.mxu0 0.0
    %663 = vmatprep.subr.mxu0 0.0
    %664 = vmatpush1.msra.mxu0 0.0
    %665 = vmatprep.subr.mxu0 0.0
    %666 = vmatpush1.msra.mxu0 0.0
    %667 = vmatprep.subr.mxu0 0.0
    %668 = vmatpush1.msra.mxu0 0.0
    %669 = vmatprep.subr.mxu0 0.0
    %670 = vmatpush1.msra.mxu0 0.0
    %671 = vmatprep.subr.mxu0 0.0
    %672 = vmatpush1.msra.mxu0 0.0
    %673 = vmatprep.subr.mxu0 0.0
    %674 = vmatpush1.msra.mxu0 0.0
    %675 = vmatprep.subr.mxu0 0.0
    %676 = vmatpush1.msra.mxu0 0.0
    %677 = vmatprep.subr.mxu0 0.0
    %678 = vmatpush1.msra.mxu0 0.0
    %679 = vmatprep.subr.mxu0 0.0
    %680 = vmatpush1.msra.mxu0 0.0
    %681 = vmatprep.subr.mxu0 0.0
    %682 = vmatpush1.msra.mxu0 0.0
    %683 = vmatprep.subr.mxu0 0.0
    %684 = vmatpush1.msra.mxu0 0.0
    %685 = vmatprep.subr.mxu0 0.0
    %686 = vmatpush1.msra.mxu0 0.0
    %687 = vmatprep.subr.mxu0 0.0
    %688 = vmatpush1.msra.mxu0 0.0
    %689 = vmatprep.subr.mxu0 0.0
    %690 = vmatpush1.msra.mxu0 0.0
    %691 = vmatprep.subr.mxu0 0.0
    %692 = vmatpush1.msra.mxu0 0.0
    %693 = vmatprep.subr.mxu0 0.0
    %694 = vmatpush1.msra.mxu0 0.0
    %695 = vmatprep.subr.mxu0 0.0
    %696 = vmatpush1.msra.mxu0 0.0
    %697 = vmatprep.subr.mxu0 0.0
    %698 = vmatpush1.msra.mxu0 0.0
    %699 = vmatprep.subr.mxu0 0.0
    %700 = vmatpush1.msra.mxu0 0.0
    %701 = vmatprep.subr.mxu0 0.0
    %702 = vmatpush1.msra.mxu0 0.0
    %703 = vmatprep.mubr.f32.mxu0 0.0
    %704 = vmatmul.mubr.f32.gmra.mrb[0].mxu0 %v637
    %v705 = vpop.f32.mrb[0].mxu0
    %v706 = vadd.f32 0.0, %v705
    %v707 = vpop.f32.mrb[0].mxu0
    %708 = vdwg.mxu0
    %v709 = vadd.f32 %v636, %v706
    %v710 = vxor.u32 %v709, 2147483648
    %v711 = vmul.f32 %v710, 1.442695
    %v712 = vpow.pop %v711
    %v713 = vadd.f32 %v712, 1.0
    %v714 = vrcp.pop %v713
    %v715 = vmul.f32 1.0, %v714
    %v716 = vtanh.pop %v709
    %v717 = vmul.f32 %v715, %v622
    %719 = vrot.lane.b32.xlu0 %v716, 32
    %v720 = vpop.permute.xlu0 %719
    %v722 = vmul.f32 %v715, %v720
    %724 = vrot.lane.b32.xlu0 %v722, 32
    %v725 = vpop.permute.xlu0 %724
    %v727 = vadd.f32 %v717, %v725
    %v728 = vtanh.pop %v727
    %730 = vrot.lane.b32.xlu0 %v728, 32
    %v731 = vpop.permute.xlu0 %730
    %v733 = vmul.f32 %v715, %v731
    %735 = vrot.lane.b32.xlu0 %v733, 64
    %v736 = vpop.permute.xlu0 %735
    %s738 = scalar_lea.vmem [#allocation3], 32
    %739 = vst.msk [vmem:[%s738] sm:$0xff] %vm68, %v736
    %s740 = scalar_lea.vmem [#allocation2], 40
    %v741 = vld [vmem:[%s740] sm:$0xff]
    %v742 = vsel %vm68, %v736, 0
    %744 = vmatprep.subr.mxu0 0.0
    %745 = vmatpush1.msra.mxu0 %v206
    %746 = vmatprep.subr.mxu0 0.0
    %747 = vmatpush1.msra.mxu0 %v207
    %748 = vmatprep.subr.mxu0 0.0
    %749 = vmatpush1.msra.mxu0 %v208
    %750 = vmatprep.subr.mxu0 0.0
    %751 = vmatpush1.msra.mxu0 %v209
    %752 = vmatprep.subr.mxu0 0.0
    %753 = vmatpush1.msra.mxu0 0.0
    %754 = vmatprep.subr.mxu0 0.0
    %755 = vmatpush1.msra.mxu0 0.0
    %756 = vmatprep.subr.mxu0 0.0
    %757 = vmatpush1.msra.mxu0 0.0
    %758 = vmatprep.subr.mxu0 0.0
    %759 = vmatpush1.msra.mxu0 0.0
    %760 = vmatprep.subr.mxu0 0.0
    %761 = vmatpush1.msra.mxu0 0.0
    %762 = vmatprep.subr.mxu0 0.0
    %763 = vmatpush1.msra.mxu0 0.0
    %764 = vmatprep.subr.mxu0 0.0
    %765 = vmatpush1.msra.mxu0 0.0
    %766 = vmatprep.subr.mxu0 0.0
    %767 = vmatpush1.msra.mxu0 0.0
    %768 = vmatprep.subr.mxu0 0.0
    %769 = vmatpush1.msra.mxu0 0.0
    %770 = vmatprep.subr.mxu0 0.0
    %771 = vmatpush1.msra.mxu0 0.0
    %772 = vmatprep.subr.mxu0 0.0
    %773 = vmatpush1.msra.mxu0 0.0
    %774 = vmatprep.subr.mxu0 0.0
    %775 = vmatpush1.msra.mxu0 0.0
    %776 = vmatprep.subr.mxu0 0.0
    %777 = vmatpush1.msra.mxu0 0.0
    %778 = vmatprep.subr.mxu0 0.0
    %779 = vmatpush1.msra.mxu0 0.0
    %780 = vmatprep.subr.mxu0 0.0
    %781 = vmatpush1.msra.mxu0 0.0
    %782 = vmatprep.subr.mxu0 0.0
    %783 = vmatpush1.msra.mxu0 0.0
    %784 = vmatprep.subr.mxu0 0.0
    %785 = vmatpush1.msra.mxu0 0.0
    %786 = vmatprep.subr.mxu0 0.0
    %787 = vmatpush1.msra.mxu0 0.0
    %788 = vmatprep.subr.mxu0 0.0
    %789 = vmatpush1.msra.mxu0 0.0
    %790 = vmatprep.subr.mxu0 0.0
    %791 = vmatpush1.msra.mxu0 0.0
    %792 = vmatprep.subr.mxu0 0.0
    %793 = vmatpush1.msra.mxu0 0.0
    %794 = vmatprep.subr.mxu0 0.0
    %795 = vmatpush1.msra.mxu0 0.0
    %796 = vmatprep.subr.mxu0 0.0
    %797 = vmatpush1.msra.mxu0 0.0
    %798 = vmatprep.subr.mxu0 0.0
    %799 = vmatpush1.msra.mxu0 0.0
    %800 = vmatprep.subr.mxu0 0.0
    %801 = vmatpush1.msra.mxu0 0.0
    %802 = vmatprep.subr.mxu0 0.0
    %803 = vmatpush1.msra.mxu0 0.0
    %804 = vmatprep.subr.mxu0 0.0
    %805 = vmatpush1.msra.mxu0 0.0
    %806 = vmatprep.subr.mxu0 0.0
    %807 = vmatpush1.msra.mxu0 0.0
    %808 = vmatprep.mubr.f32.mxu0 0.0
    %809 = vmatmul.mubr.f32.gmra.mrb[0].mxu0 %v742
    %v810 = vpop.f32.mrb[0].mxu0
    %v811 = vadd.f32 0.0, %v810
    %v812 = vpop.f32.mrb[0].mxu0
    %813 = vdwg.mxu0
    %v814 = vadd.f32 %v741, %v811
    %v815 = vxor.u32 %v814, 2147483648
    %v816 = vmul.f32 %v815, 1.442695
    %v817 = vpow.pop %v816
    %v818 = vadd.f32 %v817, 1.0
    %v819 = vrcp.pop %v818
    %v820 = vmul.f32 1.0, %v819
    %v821 = vtanh.pop %v814
    %v822 = vmul.f32 %v820, %v727
    %824 = vrot.lane.b32.xlu0 %v821, 32
    %v825 = vpop.permute.xlu0 %824
    %v827 = vmul.f32 %v820, %v825
    %829 = vrot.lane.b32.xlu0 %v827, 32
    %v830 = vpop.permute.xlu0 %829
    %v832 = vadd.f32 %v822, %v830
    %v833 = vtanh.pop %v832
    %835 = vrot.lane.b32.xlu0 %v833, 32
    %v836 = vpop.permute.xlu0 %835
    %v838 = vmul.f32 %v820, %v836
    %840 = vrot.lane.b32.xlu0 %v838, 64
    %v841 = vpop.permute.xlu0 %840
    %s843 = scalar_lea.vmem [#allocation3], 40
    %844 = vst.msk [vmem:[%s843] sm:$0xff] %vm68, %v841
    %s845 = scalar_lea.vmem [#allocation2], 48
    %v846 = vld [vmem:[%s845] sm:$0xff]
    %v847 = vsel %vm68, %v841, 0
    %849 = vmatprep.subr.mxu0 0.0
    %850 = vmatpush1.msra.mxu0 %v206
    %851 = vmatprep.subr.mxu0 0.0
    %852 = vmatpush1.msra.mxu0 %v207
    %853 = vmatprep.subr.mxu0 0.0
    %854 = vmatpush1.msra.mxu0 %v208
    %855 = vmatprep.subr.mxu0 0.0
    %856 = vmatpush1.msra.mxu0 %v209
    %857 = vmatprep.subr.mxu0 0.0
    %858 = vmatpush1.msra.mxu0 0.0
    %859 = vmatprep.subr.mxu0 0.0
    %860 = vmatpush1.msra.mxu0 0.0
    %861 = vmatprep.subr.mxu0 0.0
    %862 = vmatpush1.msra.mxu0 0.0
    %863 = vmatprep.subr.mxu0 0.0
    %864 = vmatpush1.msra.mxu0 0.0
    %865 = vmatprep.subr.mxu0 0.0
    %866 = vmatpush1.msra.mxu0 0.0
    %867 = vmatprep.subr.mxu0 0.0
    %868 = vmatpush1.msra.mxu0 0.0
    %869 = vmatprep.subr.mxu0 0.0
    %870 = vmatpush1.msra.mxu0 0.0
    %871 = vmatprep.subr.mxu0 0.0
    %872 = vmatpush1.msra.mxu0 0.0
    %873 = vmatprep.subr.mxu0 0.0
    %874 = vmatpush1.msra.mxu0 0.0
    %875 = vmatprep.subr.mxu0 0.0
    %876 = vmatpush1.msra.mxu0 0.0
    %877 = vmatprep.subr.mxu0 0.0
    %878 = vmatpush1.msra.mxu0 0.0
    %879 = vmatprep.subr.mxu0 0.0
    %880 = vmatpush1.msra.mxu0 0.0
    %881 = vmatprep.subr.mxu0 0.0
    %882 = vmatpush1.msra.mxu0 0.0
    %883 = vmatprep.subr.mxu0 0.0
    %884 = vmatpush1.msra.mxu0 0.0
    %885 = vmatprep.subr.mxu0 0.0
    %886 = vmatpush1.msra.mxu0 0.0
    %887 = vmatprep.subr.mxu0 0.0
    %888 = vmatpush1.msra.mxu0 0.0
    %889 = vmatprep.subr.mxu0 0.0
    %890 = vmatpush1.msra.mxu0 0.0
    %891 = vmatprep.subr.mxu0 0.0
    %892 = vmatpush1.msra.mxu0 0.0
    %893 = vmatprep.subr.mxu0 0.0
    %894 = vmatpush1.msra.mxu0 0.0
    %895 = vmatprep.subr.mxu0 0.0
    %896 = vmatpush1.msra.mxu0 0.0
    %897 = vmatprep.subr.mxu0 0.0
    %898 = vmatpush1.msra.mxu0 0.0
    %899 = vmatprep.subr.mxu0 0.0
    %900 = vmatpush1.msra.mxu0 0.0
    %901 = vmatprep.subr.mxu0 0.0
    %902 = vmatpush1.msra.mxu0 0.0
    %903 = vmatprep.subr.mxu0 0.0
    %904 = vmatpush1.msra.mxu0 0.0
    %905 = vmatprep.subr.mxu0 0.0
    %906 = vmatpush1.msra.mxu0 0.0
    %907 = vmatprep.subr.mxu0 0.0
    %908 = vmatpush1.msra.mxu0 0.0
    %909 = vmatprep.subr.mxu0 0.0
    %910 = vmatpush1.msra.mxu0 0.0
    %911 = vmatprep.subr.mxu0 0.0
    %912 = vmatpush1.msra.mxu0 0.0
    %913 = vmatprep.mubr.f32.mxu0 0.0
    %914 = vmatmul.mubr.f32.gmra.mrb[0].mxu0 %v847
    %v915 = vpop.f32.mrb[0].mxu0
    %v916 = vadd.f32 0.0, %v915
    %v917 = vpop.f32.mrb[0].mxu0
    %918 = vdwg.mxu0
    %v919 = vadd.f32 %v846, %v916
    %v920 = vxor.u32 %v919, 2147483648
    %v921 = vmul.f32 %v920, 1.442695
    %v922 = vpow.pop %v921
    %v923 = vadd.f32 %v922, 1.0
    %v924 = vrcp.pop %v923
    %v925 = vmul.f32 1.0, %v924
    %v926 = vtanh.pop %v919
    %v927 = vmul.f32 %v925, %v832
    %929 = vrot.lane.b32.xlu0 %v926, 32
    %v930 = vpop.permute.xlu0 %929
    %v932 = vmul.f32 %v925, %v930
    %934 = vrot.lane.b32.xlu0 %v932, 32
    %v935 = vpop.permute.xlu0 %934
    %v937 = vadd.f32 %v927, %v935
    %v938 = vtanh.pop %v937
    %940 = vrot.lane.b32.xlu0 %v938, 32
    %v941 = vpop.permute.xlu0 %940
    %v943 = vmul.f32 %v925, %v941
    %945 = vrot.lane.b32.xlu0 %v943, 64
    %v946 = vpop.permute.xlu0 %945
    %s948 = scalar_lea.vmem [#allocation3], 48
    %949 = vst.msk [vmem:[%s948] sm:$0xff] %vm68, %v946
    %s950 = scalar_lea.vmem [#allocation2], 56
    %v951 = vld [vmem:[%s950] sm:$0xff]
    %v952 = vsel %vm68, %v946, 0
    %954 = vmatprep.subr.mxu0 0.0
    %955 = vmatpush1.msra.mxu0 %v206
    %956 = vmatprep.subr.mxu0 0.0
    %957 = vmatpush1.msra.mxu0 %v207
    %958 = vmatprep.subr.mxu0 0.0
    %959 = vmatpush1.msra.mxu0 %v208
    %960 = vmatprep.subr.mxu0 0.0
    %961 = vmatpush1.msra.mxu0 %v209
    %962 = vmatprep.subr.mxu0 0.0
    %963 = vmatpush1.msra.mxu0 0.0
    %964 = vmatprep.subr.mxu0 0.0
    %965 = vmatpush1.msra.mxu0 0.0
    %966 = vmatprep.subr.mxu0 0.0
    %967 = vmatpush1.msra.mxu0 0.0
    %968 = vmatprep.subr.mxu0 0.0
    %969 = vmatpush1.msra.mxu0 0.0
    %970 = vmatprep.subr.mxu0 0.0
    %971 = vmatpush1.msra.mxu0 0.0
    %972 = vmatprep.subr.mxu0 0.0
    %973 = vmatpush1.msra.mxu0 0.0
    %974 = vmatprep.subr.mxu0 0.0
    %975 = vmatpush1.msra.mxu0 0.0
    %976 = vmatprep.subr.mxu0 0.0
    %977 = vmatpush1.msra.mxu0 0.0
    %978 = vmatprep.subr.mxu0 0.0
    %979 = vmatpush1.msra.mxu0 0.0
    %980 = vmatprep.subr.mxu0 0.0
    %981 = vmatpush1.msra.mxu0 0.0
    %982 = vmatprep.subr.mxu0 0.0
    %983 = vmatpush1.msra.mxu0 0.0
    %984 = vmatprep.subr.mxu0 0.0
    %985 = vmatpush1.msra.mxu0 0.0
    %986 = vmatprep.subr.mxu0 0.0
    %987 = vmatpush1.msra.mxu0 0.0
    %988 = vmatprep.subr.mxu0 0.0
    %989 = vmatpush1.msra.mxu0 0.0
    %990 = vmatprep.subr.mxu0 0.0
    %991 = vmatpush1.msra.mxu0 0.0
    %992 = vmatprep.subr.mxu0 0.0
    %993 = vmatpush1.msra.mxu0 0.0
    %994 = vmatprep.subr.mxu0 0.0
    %995 = vmatpush1.msra.mxu0 0.0
    %996 = vmatprep.subr.mxu0 0.0
    %997 = vmatpush1.msra.mxu0 0.0
    %998 = vmatprep.subr.mxu0 0.0
    %999 = vmatpush1.msra.mxu0 0.0
    %1000 = vmatprep.subr.mxu0 0.0
    %1001 = vmatpush1.msra.mxu0 0.0
    %1002 = vmatprep.subr.mxu0 0.0
    %1003 = vmatpush1.msra.mxu0 0.0
    %1004 = vmatprep.subr.mxu0 0.0
    %1005 = vmatpush1.msra.mxu0 0.0
    %1006 = vmatprep.subr.mxu0 0.0
    %1007 = vmatpush1.msra.mxu0 0.0
    %1008 = vmatprep.subr.mxu0 0.0
    %1009 = vmatpush1.msra.mxu0 0.0
    %1010 = vmatprep.subr.mxu0 0.0
    %1011 = vmatpush1.msra.mxu0 0.0
    %1012 = vmatprep.subr.mxu0 0.0
    %1013 = vmatpush1.msra.mxu0 0.0
    %1014 = vmatprep.subr.mxu0 0.0
    %1015 = vmatpush1.msra.mxu0 0.0
    %1016 = vmatprep.subr.mxu0 0.0
    %1017 = vmatpush1.msra.mxu0 0.0
    %1018 = vmatprep.mubr.f32.mxu0 0.0
    %1019 = vmatmul.mubr.f32.gmra.mrb[0].mxu0 %v952
    %v1020 = vpop.f32.mrb[0].mxu0
    %v1021 = vadd.f32 0.0, %v1020
    %v1022 = vpop.f32.mrb[0].mxu0
    %1023 = vdwg.mxu0
    %v1024 = vadd.f32 %v951, %v1021
    %v1025 = vxor.u32 %v1024, 2147483648
    %v1026 = vmul.f32 %v1025, 1.442695
    %v1027 = vpow.pop %v1026
    %v1028 = vadd.f32 %v1027, 1.0
    %v1029 = vrcp.pop %v1028
    %v1030 = vmul.f32 1.0, %v1029
    %v1031 = vtanh.pop %v1024
    %v1032 = vmul.f32 %v1030, %v937
    %1034 = vrot.lane.b32.xlu0 %v1031, 32
    %v1035 = vpop.permute.xlu0 %1034
    %v1037 = vmul.f32 %v1030, %v1035
    %1039 = vrot.lane.b32.xlu0 %v1037, 32
    %v1040 = vpop.permute.xlu0 %1039
    %v1042 = vadd.f32 %v1032, %v1040
    %v1043 = vtanh.pop %v1042
    %1045 = vrot.lane.b32.xlu0 %v1043, 32
    %v1046 = vpop.permute.xlu0 %1045
    %v1048 = vmul.f32 %v1030, %v1046
    %1050 = vrot.lane.b32.xlu0 %v1048, 64
    %v1051 = vpop.permute.xlu0 %1050
    %s1053 = scalar_lea.vmem [#allocation3], 56
    %1054 = vst.msk [vmem:[%s1053] sm:$0xff] %vm68, %v1051
    %1055 = vst.msk [vmem:[#allocation4] sm:$0xff] %vm68, %v1051
    %1057 = vrot.lane.b32.xlu0 %v1042, 96
    %v1058 = vpop.permute.xlu0 %1057
    %1060 = vst.msk [vmem:[#allocation5] sm:$0xff] %vm68, %v1058
    %v1061 = vld [vmem:[#allocation3] sm:$0xff]
    %v1062 = vld [vmem:[#allocation3 + $0x8] sm:$0xff]
    %v1063 = vld [vmem:[#allocation3 + $0x10] sm:$0xff]
    %v1064 = vld [vmem:[#allocation3 + $0x18] sm:$0xff]
    %v1065 = vld [vmem:[#allocation3 + $0x20] sm:$0xff]
    %v1066 = vld [vmem:[#allocation3 + $0x28] sm:$0xff]
    %v1067 = vld [vmem:[#allocation3 + $0x30] sm:$0xff]
    %v1068 = vld [vmem:[#allocation3 + $0x38] sm:$0xff]
    %v1069 = vld [vmem:[%s4] sm:$0xff]
    %v1070 = vld [vmem:[%s4 + $0x8] sm:$0xff]
    %v1071 = vld [vmem:[%s4 + $0x10] sm:$0xff]
    %v1072 = vld [vmem:[%s4 + $0x18] sm:$0xff]
    %v1073 = vld [vmem:[%s6] sm:$0x1]
    %v1075 = vlaneseq
    %v1076 = vshrl.u32 %v1075, 7
    %v1077 = vsub.s32 0, %v1076
    %v1078 = vrot.slane %v1073, %v1077
    %v1081 = vsel %vm68, %v1061, 0
    %v1084 = vsel %vm68, %v1062, 0
    %v1087 = vsel %vm68, %v1063, 0
    %v1090 = vsel %vm68, %v1064, 0
    %v1093 = vsel %vm68, %v1065, 0
    %v1096 = vsel %vm68, %v1066, 0
    %v1099 = vsel %vm68, %v1067, 0
    %v1102 = vsel %vm68, %v1068, 0
    %1104 = vmatprep.subr.mxu0 0.0
    %1105 = vmatpush1.msra.mxu0 %v1069
    %1106 = vmatprep.subr.mxu0 0.0
    %1107 = vmatpush1.msra.mxu0 %v1070
    %1108 = vmatprep.subr.mxu0 0.0
    %1109 = vmatpush1.msra.mxu0 %v1071
    %1110 = vmatprep.subr.mxu0 0.0
    %1111 = vmatpush1.msra.mxu0 %v1072
    %1112 = vmatprep.subr.mxu0 0.0
    %1113 = vmatpush1.msra.mxu0 0.0
    %1114 = vmatprep.subr.mxu0 0.0
    %1115 = vmatpush1.msra.mxu0 0.0
    %1116 = vmatprep.subr.mxu0 0.0
    %1117 = vmatpush1.msra.mxu0 0.0
    %1118 = vmatprep.subr.mxu0 0.0
    %1119 = vmatpush1.msra.mxu0 0.0
    %1120 = vmatprep.subr.mxu0 0.0
    %1121 = vmatpush1.msra.mxu0 0.0
    %1122 = vmatprep.subr.mxu0 0.0
    %1123 = vmatpush1.msra.mxu0 0.0
    %1124 = vmatprep.subr.mxu0 0.0
    %1125 = vmatpush1.msra.mxu0 0.0
    %1126 = vmatprep.subr.mxu0 0.0
    %1127 = vmatpush1.msra.mxu0 0.0
    %1128 = vmatprep.subr.mxu0 0.0
    %1129 = vmatpush1.msra.mxu0 0.0
    %1130 = vmatprep.subr.mxu0 0.0
    %1131 = vmatpush1.msra.mxu0 0.0
    %1132 = vmatprep.subr.mxu0 0.0
    %1133 = vmatpush1.msra.mxu0 0.0
    %1134 = vmatprep.subr.mxu0 0.0
    %1135 = vmatpush1.msra.mxu0 0.0
    %1136 = vmatprep.subr.mxu0 0.0
    %1137 = vmatpush1.msra.mxu0 0.0
    %1138 = vmatprep.subr.mxu0 0.0
    %1139 = vmatpush1.msra.mxu0 0.0
    %1140 = vmatprep.subr.mxu0 0.0
    %1141 = vmatpush1.msra.mxu0 0.0
    %1142 = vmatprep.subr.mxu0 0.0
    %1143 = vmatpush1.msra.mxu0 0.0
    %1144 = vmatprep.subr.mxu0 0.0
    %1145 = vmatpush1.msra.mxu0 0.0
    %1146 = vmatprep.subr.mxu0 0.0
    %1147 = vmatpush1.msra.mxu0 0.0
    %1148 = vmatprep.subr.mxu0 0.0
    %1149 = vmatpush1.msra.mxu0 0.0
    %1150 = vmatprep.subr.mxu0 0.0
    %1151 = vmatpush1.msra.mxu0 0.0
    %1152 = vmatprep.subr.mxu0 0.0
    %1153 = vmatpush1.msra.mxu0 0.0
    %1154 = vmatprep.subr.mxu0 0.0
    %1155 = vmatpush1.msra.mxu0 0.0
    %1156 = vmatprep.subr.mxu0 0.0
    %1157 = vmatpush1.msra.mxu0 0.0
    %1158 = vmatprep.subr.mxu0 0.0
    %1159 = vmatpush1.msra.mxu0 0.0
    %1160 = vmatprep.subr.mxu0 0.0
    %1161 = vmatpush1.msra.mxu0 0.0
    %1162 = vmatprep.subr.mxu0 0.0
    %1163 = vmatpush1.msra.mxu0 0.0
    %1164 = vmatprep.subr.mxu0 0.0
    %1165 = vmatpush1.msra.mxu0 0.0
    %1166 = vmatprep.subr.mxu0 0.0
    %1167 = vmatpush1.msra.mxu0 0.0
    %1168 = vmatprep.mubr.f32.mxu0 0.0
    %1169 = vmatmul.mubr.f32.gmra.mrb[0].mxu0 %v1081
    %v1170 = vpop.f32.mrb[0].mxu0
    %v1171 = vadd.f32 %v1078, %v1170
    %v1172 = vpop.f32.mrb[0].mxu0
    %1173 = vmatprep.mubr.f32.mxu0 0.0
    %1174 = vmatmul.mubr.f32.gmra.mrb[0].mxu0 %v1084
    %v1175 = vpop.f32.mrb[0].mxu0
    %v1176 = vadd.f32 %v1078, %v1175
    %v1177 = vpop.f32.mrb[0].mxu0
    %1178 = vmatprep.mubr.f32.mxu0 0.0
    %1179 = vmatmul.mubr.f32.gmra.mrb[0].mxu0 %v1087
    %v1180 = vpop.f32.mrb[0].mxu0
    %v1181 = vadd.f32 %v1078, %v1180
    %v1182 = vpop.f32.mrb[0].mxu0
    %1183 = vmatprep.mubr.f32.mxu0 0.0
    %1184 = vmatmul.mubr.f32.gmra.mrb[0].mxu0 %v1090
    %v1185 = vpop.f32.mrb[0].mxu0
    %v1186 = vadd.f32 %v1078, %v1185
    %v1187 = vpop.f32.mrb[0].mxu0
    %1188 = vmatprep.mubr.f32.mxu0 0.0
    %1189 = vmatmul.mubr.f32.gmra.mrb[0].mxu0 %v1093
    %v1190 = vpop.f32.mrb[0].mxu0
    %v1191 = vadd.f32 %v1078, %v1190
    %v1192 = vpop.f32.mrb[0].mxu0
    %1193 = vmatprep.mubr.f32.mxu0 0.0
    %1194 = vmatmul.mubr.f32.gmra.mrb[0].mxu0 %v1096
    %v1195 = vpop.f32.mrb[0].mxu0
    %v1196 = vadd.f32 %v1078, %v1195
    %v1197 = vpop.f32.mrb[0].mxu0
    %1198 = vmatprep.mubr.f32.mxu0 0.0
    %1199 = vmatmul.mubr.f32.gmra.mrb[0].mxu0 %v1099
    %v1200 = vpop.f32.mrb[0].mxu0
    %v1201 = vadd.f32 %v1078, %v1200
    %v1202 = vpop.f32.mrb[0].mxu0
    %1203 = vmatprep.mubr.f32.mxu0 0.0
    %1204 = vmatmul.mubr.f32.gmra.mrb[0].mxu0 %v1102
    %v1205 = vpop.f32.mrb[0].mxu0
    %v1206 = vadd.f32 %v1078, %v1205
    %v1207 = vpop.f32.mrb[0].mxu0
    %1208 = vdwg.mxu0
    %1209 = vst [vmem:[#allocation2] sm:$0xff] %v1171
    %1210 = vst [vmem:[#allocation2 + $0x8] sm:$0xff] %v1176
    %1211 = vst [vmem:[#allocation2 + $0x10] sm:$0xff] %v1181
    %1212 = vst [vmem:[#allocation2 + $0x18] sm:$0xff] %v1186
    %1213 = vst [vmem:[#allocation2 + $0x20] sm:$0xff] %v1191
    %1214 = vst [vmem:[#allocation2 + $0x28] sm:$0xff] %v1196
    %1215 = vst [vmem:[#allocation2 + $0x30] sm:$0xff] %v1201
    %1216 = vst [vmem:[#allocation2 + $0x38] sm:$0xff] %v1206
    %v1217 = vld [vmem:[#allocation6] sm:$0xff]
    %v1218 = vld [vmem:[#allocation6 + $0x8] sm:$0xff]
    %v1219 = vld [vmem:[#allocation6 + $0x10] sm:$0xff]
    %v1220 = vld [vmem:[#allocation6 + $0x18] sm:$0xff]
    %s1221 = scalar_lea.vmem [#allocation4], 8
    %v1222 = vld [vmem:[%s1221] sm:$0xff]
    %s1223 = scalar_lea.vmem [#allocation5], 8
    %v1224 = vld [vmem:[%s1223] sm:$0xff]
    %v1225 = vld [vmem:[#allocation2] sm:$0xff]
    %v1227 = vsel %vm68, %v1222, 0
    %1229 = vmatprep.subr.mxu0 0.0
    %1230 = vmatpush1.msra.mxu0 %v1217
    %1231 = vmatprep.subr.mxu0 0.0
    %1232 = vmatpush1.msra.mxu0 %v1218
    %1233 = vmatprep.subr.mxu0 0.0
    %1234 = vmatpush1.msra.mxu0 %v1219
    %1235 = vmatprep.subr.mxu0 0.0
    %1236 = vmatpush1.msra.mxu0 %v1220
    %1237 = vmatprep.subr.mxu0 0.0
    %1238 = vmatpush1.msra.mxu0 0.0
    %1239 = vmatprep.subr.mxu0 0.0
    %1240 = vmatpush1.msra.mxu0 0.0
    %1241 = vmatprep.subr.mxu0 0.0
    %1242 = vmatpush1.msra.mxu0 0.0
    %1243 = vmatprep.subr.mxu0 0.0
    %1244 = vmatpush1.msra.mxu0 0.0
    %1245 = vmatprep.subr.mxu0 0.0
    %1246 = vmatpush1.msra.mxu0 0.0
    %1247 = vmatprep.subr.mxu0 0.0
    %1248 = vmatpush1.msra.mxu0 0.0
    %1249 = vmatprep.subr.mxu0 0.0
    %1250 = vmatpush1.msra.mxu0 0.0
    %1251 = vmatprep.subr.mxu0 0.0
    %1252 = vmatpush1.msra.mxu0 0.0
    %1253 = vmatprep.subr.mxu0 0.0
    %1254 = vmatpush1.msra.mxu0 0.0
    %1255 = vmatprep.subr.mxu0 0.0
    %1256 = vmatpush1.msra.mxu0 0.0
    %1257 = vmatprep.subr.mxu0 0.0
    %1258 = vmatpush1.msra.mxu0 0.0
    %1259 = vmatprep.subr.mxu0 0.0
    %1260 = vmatpush1.msra.mxu0 0.0
    %1261 = vmatprep.subr.mxu0 0.0
    %1262 = vmatpush1.msra.mxu0 0.0
    %1263 = vmatprep.subr.mxu0 0.0
    %1264 = vmatpush1.msra.mxu0 0.0
    %1265 = vmatprep.subr.mxu0 0.0
    %1266 = vmatpush1.msra.mxu0 0.0
    %1267 = vmatprep.subr.mxu0 0.0
    %1268 = vmatpush1.msra.mxu0 0.0
    %1269 = vmatprep.subr.mxu0 0.0
    %1270 = vmatpush1.msra.mxu0 0.0
    %1271 = vmatprep.subr.mxu0 0.0
    %1272 = vmatpush1.msra.mxu0 0.0
    %1273 = vmatprep.subr.mxu0 0.0
    %1274 = vmatpush1.msra.mxu0 0.0
    %1275 = vmatprep.subr.mxu0 0.0
    %1276 = vmatpush1.msra.mxu0 0.0
    %1277 = vmatprep.subr.mxu0 0.0
    %1278 = vmatpush1.msra.mxu0 0.0
    %1279 = vmatprep.subr.mxu0 0.0
    %1280 = vmatpush1.msra.mxu0 0.0
    %1281 = vmatprep.subr.mxu0 0.0
    %1282 = vmatpush1.msra.mxu0 0.0
    %1283 = vmatprep.subr.mxu0 0.0
    %1284 = vmatpush1.msra.mxu0 0.0
    %1285 = vmatprep.subr.mxu0 0.0
    %1286 = vmatpush1.msra.mxu0 0.0
    %1287 = vmatprep.subr.mxu0 0.0
    %1288 = vmatpush1.msra.mxu0 0.0
    %1289 = vmatprep.subr.mxu0 0.0
    %1290 = vmatpush1.msra.mxu0 0.0
    %1291 = vmatprep.subr.mxu0 0.0
    %1292 = vmatpush1.msra.mxu0 0.0
    %1293 = vmatprep.mubr.f32.mxu0 0.0
    %1294 = vmatmul.mubr.f32.gmra.mrb[0].mxu0 %v1227
    %v1295 = vpop.f32.mrb[0].mxu0
    %v1296 = vadd.f32 0.0, %v1295
    %v1297 = vpop.f32.mrb[0].mxu0
    %1298 = vdwg.mxu0
    %v1299 = vadd.f32 %v1225, %v1296
    %v1300 = vxor.u32 %v1299, 2147483648
    %v1301 = vmul.f32 %v1300, 1.442695
    %v1302 = vpow.pop %v1301
    %v1303 = vadd.f32 %v1302, 1.0
    %v1304 = vrcp.pop %v1303
    %v1305 = vmul.f32 1.0, %v1304
    %v1306 = vtanh.pop %v1299
    %1308 = vrot.lane.b32.xlu0 %v1224, 32
    %v1309 = vpop.permute.xlu0 %1308
    %v1311 = vmul.f32 %v1305, %v1309
    %1313 = vrot.lane.b32.xlu0 %v1306, 32
    %v1314 = vpop.permute.xlu0 %1313
    %v1316 = vmul.f32 %v1305, %v1314
    %1318 = vrot.lane.b32.xlu0 %v1316, 32
    %v1319 = vpop.permute.xlu0 %1318
    %v1321 = vadd.f32 %v1311, %v1319
    %v1322 = vtanh.pop %v1321
    %1324 = vrot.lane.b32.xlu0 %v1322, 32
    %v1325 = vpop.permute.xlu0 %1324
    %v1327 = vmul.f32 %v1305, %v1325
    %1329 = vrot.lane.b32.xlu0 %v1327, 64
    %v1330 = vpop.permute.xlu0 %1329
    %1332 = vst.msk [vmem:[%s7] sm:$0xff] %vm68, %v1330
    %v1333 = vld [vmem:[%s320] sm:$0xff]
    %v1334 = vsel %vm68, %v1330, 0
    %1336 = vmatprep.subr.mxu0 0.0
    %1337 = vmatpush1.msra.mxu0 %v1217
    %1338 = vmatprep.subr.mxu0 0.0
    %1339 = vmatpush1.msra.mxu0 %v1218
    %1340 = vmatprep.subr.mxu0 0.0
    %1341 = vmatpush1.msra.mxu0 %v1219
    %1342 = vmatprep.subr.mxu0 0.0
    %1343 = vmatpush1.msra.mxu0 %v1220
    %1344 = vmatprep.subr.mxu0 0.0
    %1345 = vmatpush1.msra.mxu0 0.0
    %1346 = vmatprep.subr.mxu0 0.0
    %1347 = vmatpush1.msra.mxu0 0.0
    %1348 = vmatprep.subr.mxu0 0.0
    %1349 = vmatpush1.msra.mxu0 0.0
    %1350 = vmatprep.subr.mxu0 0.0
    %1351 = vmatpush1.msra.mxu0 0.0
    %1352 = vmatprep.subr.mxu0 0.0
    %1353 = vmatpush1.msra.mxu0 0.0
    %1354 = vmatprep.subr.mxu0 0.0
    %1355 = vmatpush1.msra.mxu0 0.0
    %1356 = vmatprep.subr.mxu0 0.0
    %1357 = vmatpush1.msra.mxu0 0.0
    %1358 = vmatprep.subr.mxu0 0.0
    %1359 = vmatpush1.msra.mxu0 0.0
    %1360 = vmatprep.subr.mxu0 0.0
    %1361 = vmatpush1.msra.mxu0 0.0
    %1362 = vmatprep.subr.mxu0 0.0
    %1363 = vmatpush1.msra.mxu0 0.0
    %1364 = vmatprep.subr.mxu0 0.0
    %1365 = vmatpush1.msra.mxu0 0.0
    %1366 = vmatprep.subr.mxu0 0.0
    %1367 = vmatpush1.msra.mxu0 0.0
    %1368 = vmatprep.subr.mxu0 0.0
    %1369 = vmatpush1.msra.mxu0 0.0
    %1370 = vmatprep.subr.mxu0 0.0
    %1371 = vmatpush1.msra.mxu0 0.0
    %1372 = vmatprep.subr.mxu0 0.0
    %1373 = vmatpush1.msra.mxu0 0.0
    %1374 = vmatprep.subr.mxu0 0.0
    %1375 = vmatpush1.msra.mxu0 0.0
    %1376 = vmatprep.subr.mxu0 0.0
    %1377 = vmatpush1.msra.mxu0 0.0
    %1378 = vmatprep.subr.mxu0 0.0
    %1379 = vmatpush1.msra.mxu0 0.0
    %1380 = vmatprep.subr.mxu0 0.0
    %1381 = vmatpush1.msra.mxu0 0.0
    %1382 = vmatprep.subr.mxu0 0.0
    %1383 = vmatpush1.msra.mxu0 0.0
    %1384 = vmatprep.subr.mxu0 0.0
    %1385 = vmatpush1.msra.mxu0 0.0
    %1386 = vmatprep.subr.mxu0 0.0
    %1387 = vmatpush1.msra.mxu0 0.0
    %1388 = vmatprep.subr.mxu0 0.0
    %1389 = vmatpush1.msra.mxu0 0.0
    %1390 = vmatprep.subr.mxu0 0.0
    %1391 = vmatpush1.msra.mxu0 0.0
    %1392 = vmatprep.subr.mxu0 0.0
    %1393 = vmatpush1.msra.mxu0 0.0
    %1394 = vmatprep.subr.mxu0 0.0
    %1395 = vmatpush1.msra.mxu0 0.0
    %1396 = vmatprep.subr.mxu0 0.0
    %1397 = vmatpush1.msra.mxu0 0.0
    %1398 = vmatprep.subr.mxu0 0.0
    %1399 = vmatpush1.msra.mxu0 0.0
    %1400 = vmatprep.mubr.f32.mxu0 0.0
    %1401 = vmatmul.mubr.f32.gmra.mrb[0].mxu0 %v1334
    %v1402 = vpop.f32.mrb[0].mxu0
    %v1403 = vadd.f32 0.0, %v1402
    %v1404 = vpop.f32.mrb[0].mxu0
    %1405 = vdwg.mxu0
    %v1406 = vadd.f32 %v1333, %v1403
    %v1407 = vxor.u32 %v1406, 2147483648
    %v1408 = vmul.f32 %v1407, 1.442695
    %v1409 = vpow.pop %v1408
    %v1410 = vadd.f32 %v1409, 1.0
    %v1411 = vrcp.pop %v1410
    %v1412 = vmul.f32 1.0, %v1411
    %v1413 = vtanh.pop %v1406
    %v1414 = vmul.f32 %v1412, %v1321
    %1416 = vrot.lane.b32.xlu0 %v1413, 32
    %v1417 = vpop.permute.xlu0 %1416
    %v1419 = vmul.f32 %v1412, %v1417
    %1421 = vrot.lane.b32.xlu0 %v1419, 32
    %v1422 = vpop.permute.xlu0 %1421
    %v1424 = vadd.f32 %v1414, %v1422
    %v1425 = vtanh.pop %v1424
    %1427 = vrot.lane.b32.xlu0 %v1425, 32
    %v1428 = vpop.permute.xlu0 %1427
    %v1430 = vmul.f32 %v1412, %v1428
    %1432 = vrot.lane.b32.xlu0 %v1430, 64
    %v1433 = vpop.permute.xlu0 %1432
    %s1435 = scalar_lea.vmem %s7, 8
    %1436 = vst.msk [vmem:[%s1435] sm:$0xff] %vm68, %v1433
    %v1437 = vld [vmem:[%s425] sm:$0xff]
    %v1438 = vsel %vm68, %v1433, 0
    %1440 = vmatprep.subr.mxu0 0.0
    %1441 = vmatpush1.msra.mxu0 %v1217
    %1442 = vmatprep.subr.mxu0 0.0
    %1443 = vmatpush1.msra.mxu0 %v1218
    %1444 = vmatprep.subr.mxu0 0.0
    %1445 = vmatpush1.msra.mxu0 %v1219
    %1446 = vmatprep.subr.mxu0 0.0
    %1447 = vmatpush1.msra.mxu0 %v1220
    %1448 = vmatprep.subr.mxu0 0.0
    %1449 = vmatpush1.msra.mxu0 0.0
    %1450 = vmatprep.subr.mxu0 0.0
    %1451 = vmatpush1.msra.mxu0 0.0
    %1452 = vmatprep.subr.mxu0 0.0
    %1453 = vmatpush1.msra.mxu0 0.0
    %1454 = vmatprep.subr.mxu0 0.0
    %1455 = vmatpush1.msra.mxu0 0.0
    %1456 = vmatprep.subr.mxu0 0.0
    %1457 = vmatpush1.msra.mxu0 0.0
    %1458 = vmatprep.subr.mxu0 0.0
    %1459 = vmatpush1.msra.mxu0 0.0
    %1460 = vmatprep.subr.mxu0 0.0
    %1461 = vmatpush1.msra.mxu0 0.0
    %1462 = vmatprep.subr.mxu0 0.0
    %1463 = vmatpush1.msra.mxu0 0.0
    %1464 = vmatprep.subr.mxu0 0.0
    %1465 = vmatpush1.msra.mxu0 0.0
    %1466 = vmatprep.subr.mxu0 0.0
    %1467 = vmatpush1.msra.mxu0 0.0
    %1468 = vmatprep.subr.mxu0 0.0
    %1469 = vmatpush1.msra.mxu0 0.0
    %1470 = vmatprep.subr.mxu0 0.0
    %1471 = vmatpush1.msra.mxu0 0.0
    %1472 = vmatprep.subr.mxu0 0.0
    %1473 = vmatpush1.msra.mxu0 0.0
    %1474 = vmatprep.subr.mxu0 0.0
    %1475 = vmatpush1.msra.mxu0 0.0
    %1476 = vmatprep.subr.mxu0 0.0
    %1477 = vmatpush1.msra.mxu0 0.0
    %1478 = vmatprep.subr.mxu0 0.0
    %1479 = vmatpush1.msra.mxu0 0.0
    %1480 = vmatprep.subr.mxu0 0.0
    %1481 = vmatpush1.msra.mxu0 0.0
    %1482 = vmatprep.subr.mxu0 0.0
    %1483 = vmatpush1.msra.mxu0 0.0
    %1484 = vmatprep.subr.mxu0 0.0
    %1485 = vmatpush1.msra.mxu0 0.0
    %1486 = vmatprep.subr.mxu0 0.0
    %1487 = vmatpush1.msra.mxu0 0.0
    %1488 = vmatprep.subr.mxu0 0.0
    %1489 = vmatpush1.msra.mxu0 0.0
    %1490 = vmatprep.subr.mxu0 0.0
    %1491 = vmatpush1.msra.mxu0 0.0
    %1492 = vmatprep.subr.mxu0 0.0
    %1493 = vmatpush1.msra.mxu0 0.0
    %1494 = vmatprep.subr.mxu0 0.0
    %1495 = vmatpush1.msra.mxu0 0.0
    %1496 = vmatprep.subr.mxu0 0.0
    %1497 = vmatpush1.msra.mxu0 0.0
    %1498 = vmatprep.subr.mxu0 0.0
    %1499 = vmatpush1.msra.mxu0 0.0
    %1500 = vmatprep.subr.mxu0 0.0
    %1501 = vmatpush1.msra.mxu0 0.0
    %1502 = vmatprep.subr.mxu0 0.0
    %1503 = vmatpush1.msra.mxu0 0.0
    %1504 = vmatprep.mubr.f32.mxu0 0.0
    %1505 = vmatmul.mubr.f32.gmra.mrb[0].mxu0 %v1438
    %v1506 = vpop.f32.mrb[0].mxu0
    %v1507 = vadd.f32 0.0, %v1506
    %v1508 = vpop.f32.mrb[0].mxu0
    %1509 = vdwg.mxu0
    %v1510 = vadd.f32 %v1437, %v1507
    %v1511 = vxor.u32 %v1510, 2147483648
    %v1512 = vmul.f32 %v1511, 1.442695
    %v1513 = vpow.pop %v1512
    %v1514 = vadd.f32 %v1513, 1.0
    %v1515 = vrcp.pop %v1514
    %v1516 = vmul.f32 1.0, %v1515
    %v1517 = vtanh.pop %v1510
    %v1518 = vmul.f32 %v1516, %v1424
    %1520 = vrot.lane.b32.xlu0 %v1517, 32
    %v1521 = vpop.permute.xlu0 %1520
    %v1523 = vmul.f32 %v1516, %v1521
    %1525 = vrot.lane.b32.xlu0 %v1523, 32
    %v1526 = vpop.permute.xlu0 %1525
    %v1528 = vadd.f32 %v1518, %v1526
    %v1529 = vtanh.pop %v1528
    %1531 = vrot.lane.b32.xlu0 %v1529, 32
    %v1532 = vpop.permute.xlu0 %1531
    %v1534 = vmul.f32 %v1516, %v1532
    %1536 = vrot.lane.b32.xlu0 %v1534, 64
    %v1537 = vpop.permute.xlu0 %1536
    %s1539 = scalar_lea.vmem %s7, 16
    %1540 = vst.msk [vmem:[%s1539] sm:$0xff] %vm68, %v1537
    %v1541 = vld [vmem:[%s530] sm:$0xff]
    %v1542 = vsel %vm68, %v1537, 0
    %1544 = vmatprep.subr.mxu0 0.0
    %1545 = vmatpush1.msra.mxu0 %v1217
    %1546 = vmatprep.subr.mxu0 0.0
    %1547 = vmatpush1.msra.mxu0 %v1218
    %1548 = vmatprep.subr.mxu0 0.0
    %1549 = vmatpush1.msra.mxu0 %v1219
    %1550 = vmatprep.subr.mxu0 0.0
    %1551 = vmatpush1.msra.mxu0 %v1220
    %1552 = vmatprep.subr.mxu0 0.0
    %1553 = vmatpush1.msra.mxu0 0.0
    %1554 = vmatprep.subr.mxu0 0.0
    %1555 = vmatpush1.msra.mxu0 0.0
    %1556 = vmatprep.subr.mxu0 0.0
    %1557 = vmatpush1.msra.mxu0 0.0
    %1558 = vmatprep.subr.mxu0 0.0
    %1559 = vmatpush1.msra.mxu0 0.0
    %1560 = vmatprep.subr.mxu0 0.0
    %1561 = vmatpush1.msra.mxu0 0.0
    %1562 = vmatprep.subr.mxu0 0.0
    %1563 = vmatpush1.msra.mxu0 0.0
    %1564 = vmatprep.subr.mxu0 0.0
    %1565 = vmatpush1.msra.mxu0 0.0
    %1566 = vmatprep.subr.mxu0 0.0
    %1567 = vmatpush1.msra.mxu0 0.0
    %1568 = vmatprep.subr.mxu0 0.0
    %1569 = vmatpush1.msra.mxu0 0.0
    %1570 = vmatprep.subr.mxu0 0.0
    %1571 = vmatpush1.msra.mxu0 0.0
    %1572 = vmatprep.subr.mxu0 0.0
    %1573 = vmatpush1.msra.mxu0 0.0
    %1574 = vmatprep.subr.mxu0 0.0
    %1575 = vmatpush1.msra.mxu0 0.0
    %1576 = vmatprep.subr.mxu0 0.0
    %1577 = vmatpush1.msra.mxu0 0.0
    %1578 = vmatprep.subr.mxu0 0.0
    %1579 = vmatpush1.msra.mxu0 0.0
    %1580 = vmatprep.subr.mxu0 0.0
    %1581 = vmatpush1.msra.mxu0 0.0
    %1582 = vmatprep.subr.mxu0 0.0
    %1583 = vmatpush1.msra.mxu0 0.0
    %1584 = vmatprep.subr.mxu0 0.0
    %1585 = vmatpush1.msra.mxu0 0.0
    %1586 = vmatprep.subr.mxu0 0.0
    %1587 = vmatpush1.msra.mxu0 0.0
    %1588 = vmatprep.subr.mxu0 0.0
    %1589 = vmatpush1.msra.mxu0 0.0
    %1590 = vmatprep.subr.mxu0 0.0
    %1591 = vmatpush1.msra.mxu0 0.0
    %1592 = vmatprep.subr.mxu0 0.0
    %1593 = vmatpush1.msra.mxu0 0.0
    %1594 = vmatprep.subr.mxu0 0.0
    %1595 = vmatpush1.msra.mxu0 0.0
    %1596 = vmatprep.subr.mxu0 0.0
    %1597 = vmatpush1.msra.mxu0 0.0
    %1598 = vmatprep.subr.mxu0 0.0
    %1599 = vmatpush1.msra.mxu0 0.0
    %1600 = vmatprep.subr.mxu0 0.0
    %1601 = vmatpush1.msra.mxu0 0.0
    %1602 = vmatprep.subr.mxu0 0.0
    %1603 = vmatpush1.msra.mxu0 0.0
    %1604 = vmatprep.subr.mxu0 0.0
    %1605 = vmatpush1.msra.mxu0 0.0
    %1606 = vmatprep.subr.mxu0 0.0
    %1607 = vmatpush1.msra.mxu0 0.0
    %1608 = vmatprep.mubr.f32.mxu0 0.0
    %1609 = vmatmul.mubr.f32.gmra.mrb[0].mxu0 %v1542
    %v1610 = vpop.f32.mrb[0].mxu0
    %v1611 = vadd.f32 0.0, %v1610
    %v1612 = vpop.f32.mrb[0].mxu0
    %1613 = vdwg.mxu0
    %v1614 = vadd.f32 %v1541, %v1611
    %v1615 = vxor.u32 %v1614, 2147483648
    %v1616 = vmul.f32 %v1615, 1.442695
    %v1617 = vpow.pop %v1616
    %v1618 = vadd.f32 %v1617, 1.0
    %v1619 = vrcp.pop %v1618
    %v1620 = vmul.f32 1.0, %v1619
    %v1621 = vtanh.pop %v1614
    %v1622 = vmul.f32 %v1620, %v1528
    %1624 = vrot.lane.b32.xlu0 %v1621, 32
    %v1625 = vpop.permute.xlu0 %1624
    %v1627 = vmul.f32 %v1620, %v1625
    %1629 = vrot.lane.b32.xlu0 %v1627, 32
    %v1630 = vpop.permute.xlu0 %1629
    %v1632 = vadd.f32 %v1622, %v1630
    %v1633 = vtanh.pop %v1632
    %1635 = vrot.lane.b32.xlu0 %v1633, 32
    %v1636 = vpop.permute.xlu0 %1635
    %v1638 = vmul.f32 %v1620, %v1636
    %1640 = vrot.lane.b32.xlu0 %v1638, 64
    %v1641 = vpop.permute.xlu0 %1640
    %s1643 = scalar_lea.vmem %s7, 24
    %1644 = vst.msk [vmem:[%s1643] sm:$0xff] %vm68, %v1641
    %v1645 = vld [vmem:[%s635] sm:$0xff]
    %v1646 = vsel %vm68, %v1641, 0
    %1648 = vmatprep.subr.mxu0 0.0
    %1649 = vmatpush1.msra.mxu0 %v1217
    %1650 = vmatprep.subr.mxu0 0.0
    %1651 = vmatpush1.msra.mxu0 %v1218
    %1652 = vmatprep.subr.mxu0 0.0
    %1653 = vmatpush1.msra.mxu0 %v1219
    %1654 = vmatprep.subr.mxu0 0.0
    %1655 = vmatpush1.msra.mxu0 %v1220
    %1656 = vmatprep.subr.mxu0 0.0
    %1657 = vmatpush1.msra.mxu0 0.0
    %1658 = vmatprep.subr.mxu0 0.0
    %1659 = vmatpush1.msra.mxu0 0.0
    %1660 = vmatprep.subr.mxu0 0.0
    %1661 = vmatpush1.msra.mxu0 0.0
    %1662 = vmatprep.subr.mxu0 0.0
    %1663 = vmatpush1.msra.mxu0 0.0
    %1664 = vmatprep.subr.mxu0 0.0
    %1665 = vmatpush1.msra.mxu0 0.0
    %1666 = vmatprep.subr.mxu0 0.0
    %1667 = vmatpush1.msra.mxu0 0.0
    %1668 = vmatprep.subr.mxu0 0.0
    %1669 = vmatpush1.msra.mxu0 0.0
    %1670 = vmatprep.subr.mxu0 0.0
    %1671 = vmatpush1.msra.mxu0 0.0
    %1672 = vmatprep.subr.mxu0 0.0
    %1673 = vmatpush1.msra.mxu0 0.0
    %1674 = vmatprep.subr.mxu0 0.0
    %1675 = vmatpush1.msra.mxu0 0.0
    %1676 = vmatprep.subr.mxu0 0.0
    %1677 = vmatpush1.msra.mxu0 0.0
    %1678 = vmatprep.subr.mxu0 0.0
    %1679 = vmatpush1.msra.mxu0 0.0
    %1680 = vmatprep.subr.mxu0 0.0
    %1681 = vmatpush1.msra.mxu0 0.0
    %1682 = vmatprep.subr.mxu0 0.0
    %1683 = vmatpush1.msra.mxu0 0.0
    %1684 = vmatprep.subr.mxu0 0.0
    %1685 = vmatpush1.msra.mxu0 0.0
    %1686 = vmatprep.subr.mxu0 0.0
    %1687 = vmatpush1.msra.mxu0 0.0
    %1688 = vmatprep.subr.mxu0 0.0
    %1689 = vmatpush1.msra.mxu0 0.0
    %1690 = vmatprep.subr.mxu0 0.0
    %1691 = vmatpush1.msra.mxu0 0.0
    %1692 = vmatprep.subr.mxu0 0.0
    %1693 = vmatpush1.msra.mxu0 0.0
    %1694 = vmatprep.subr.mxu0 0.0
    %1695 = vmatpush1.msra.mxu0 0.0
    %1696 = vmatprep.subr.mxu0 0.0
    %1697 = vmatpush1.msra.mxu0 0.0
    %1698 = vmatprep.subr.mxu0 0.0
    %1699 = vmatpush1.msra.mxu0 0.0
    %1700 = vmatprep.subr.mxu0 0.0
    %1701 = vmatpush1.msra.mxu0 0.0
    %1702 = vmatprep.subr.mxu0 0.0
    %1703 = vmatpush1.msra.mxu0 0.0
    %1704 = vmatprep.subr.mxu0 0.0
    %1705 = vmatpush1.msra.mxu0 0.0
    %1706 = vmatprep.subr.mxu0 0.0
    %1707 = vmatpush1.msra.mxu0 0.0
    %1708 = vmatprep.subr.mxu0 0.0
    %1709 = vmatpush1.msra.mxu0 0.0
    %1710 = vmatprep.subr.mxu0 0.0
    %1711 = vmatpush1.msra.mxu0 0.0
    %1712 = vmatprep.mubr.f32.mxu0 0.0
    %1713 = vmatmul.mubr.f32.gmra.mrb[0].mxu0 %v1646
    %v1714 = vpop.f32.mrb[0].mxu0
    %v1715 = vadd.f32 0.0, %v1714
    %v1716 = vpop.f32.mrb[0].mxu0
    %1717 = vdwg.mxu0
    %v1718 = vadd.f32 %v1645, %v1715
    %v1719 = vxor.u32 %v1718, 2147483648
    %v1720 = vmul.f32 %v1719, 1.442695
    %v1721 = vpow.pop %v1720
    %v1722 = vadd.f32 %v1721, 1.0
    %v1723 = vrcp.pop %v1722
    %v1724 = vmul.f32 1.0, %v1723
    %v1725 = vtanh.pop %v1718
    %v1726 = vmul.f32 %v1724, %v1632
    %1728 = vrot.lane.b32.xlu0 %v1725, 32
    %v1729 = vpop.permute.xlu0 %1728
    %v1731 = vmul.f32 %v1724, %v1729
    %1733 = vrot.lane.b32.xlu0 %v1731, 32
    %v1734 = vpop.permute.xlu0 %1733
    %v1736 = vadd.f32 %v1726, %v1734
    %v1737 = vtanh.pop %v1736
    %1739 = vrot.lane.b32.xlu0 %v1737, 32
    %v1740 = vpop.permute.xlu0 %1739
    %v1742 = vmul.f32 %v1724, %v1740
    %1744 = vrot.lane.b32.xlu0 %v1742, 64
    %v1745 = vpop.permute.xlu0 %1744
    %s1747 = scalar_lea.vmem %s7, 32
    %1748 = vst.msk [vmem:[%s1747] sm:$0xff] %vm68, %v1745
    %v1749 = vld [vmem:[%s740] sm:$0xff]
    %v1750 = vsel %vm68, %v1745, 0
    %1752 = vmatprep.subr.mxu0 0.0
    %1753 = vmatpush1.msra.mxu0 %v1217
    %1754 = vmatprep.subr.mxu0 0.0
    %1755 = vmatpush1.msra.mxu0 %v1218
    %1756 = vmatprep.subr.mxu0 0.0
    %1757 = vmatpush1.msra.mxu0 %v1219
    %1758 = vmatprep.subr.mxu0 0.0
    %1759 = vmatpush1.msra.mxu0 %v1220
    %1760 = vmatprep.subr.mxu0 0.0
    %1761 = vmatpush1.msra.mxu0 0.0
    %1762 = vmatprep.subr.mxu0 0.0
    %1763 = vmatpush1.msra.mxu0 0.0
    %1764 = vmatprep.subr.mxu0 0.0
    %1765 = vmatpush1.msra.mxu0 0.0
    %1766 = vmatprep.subr.mxu0 0.0
    %1767 = vmatpush1.msra.mxu0 0.0
    %1768 = vmatprep.subr.mxu0 0.0
    %1769 = vmatpush1.msra.mxu0 0.0
    %1770 = vmatprep.subr.mxu0 0.0
    %1771 = vmatpush1.msra.mxu0 0.0
    %1772 = vmatprep.subr.mxu0 0.0
    %1773 = vmatpush1.msra.mxu0 0.0
    %1774 = vmatprep.subr.mxu0 0.0
    %1775 = vmatpush1.msra.mxu0 0.0
    %1776 = vmatprep.subr.mxu0 0.0
    %1777 = vmatpush1.msra.mxu0 0.0
    %1778 = vmatprep.subr.mxu0 0.0
    %1779 = vmatpush1.msra.mxu0 0.0
    %1780 = vmatprep.subr.mxu0 0.0
    %1781 = vmatpush1.msra.mxu0 0.0
    %1782 = vmatprep.subr.mxu0 0.0
    %1783 = vmatpush1.msra.mxu0 0.0
    %1784 = vmatprep.subr.mxu0 0.0
    %1785 = vmatpush1.msra.mxu0 0.0
    %1786 = vmatprep.subr.mxu0 0.0
    %1787 = vmatpush1.msra.mxu0 0.0
    %1788 = vmatprep.subr.mxu0 0.0
    %1789 = vmatpush1.msra.mxu0 0.0
    %1790 = vmatprep.subr.mxu0 0.0
    %1791 = vmatpush1.msra.mxu0 0.0
    %1792 = vmatprep.subr.mxu0 0.0
    %1793 = vmatpush1.msra.mxu0 0.0
    %1794 = vmatprep.subr.mxu0 0.0
    %1795 = vmatpush1.msra.mxu0 0.0
    %1796 = vmatprep.subr.mxu0 0.0
    %1797 = vmatpush1.msra.mxu0 0.0
    %1798 = vmatprep.subr.mxu0 0.0
    %1799 = vmatpush1.msra.mxu0 0.0
    %1800 = vmatprep.subr.mxu0 0.0
    %1801 = vmatpush1.msra.mxu0 0.0
    %1802 = vmatprep.subr.mxu0 0.0
    %1803 = vmatpush1.msra.mxu0 0.0
    %1804 = vmatprep.subr.mxu0 0.0
    %1805 = vmatpush1.msra.mxu0 0.0
    %1806 = vmatprep.subr.mxu0 0.0
    %1807 = vmatpush1.msra.mxu0 0.0
    %1808 = vmatprep.subr.mxu0 0.0
    %1809 = vmatpush1.msra.mxu0 0.0
    %1810 = vmatprep.subr.mxu0 0.0
    %1811 = vmatpush1.msra.mxu0 0.0
    %1812 = vmatprep.subr.mxu0 0.0
    %1813 = vmatpush1.msra.mxu0 0.0
    %1814 = vmatprep.subr.mxu0 0.0
    %1815 = vmatpush1.msra.mxu0 0.0
    %1816 = vmatprep.mubr.f32.mxu0 0.0
    %1817 = vmatmul.mubr.f32.gmra.mrb[0].mxu0 %v1750
    %v1818 = vpop.f32.mrb[0].mxu0
    %v1819 = vadd.f32 0.0, %v1818
    %v1820 = vpop.f32.mrb[0].mxu0
    %1821 = vdwg.mxu0
    %v1822 = vadd.f32 %v1749, %v1819
    %v1823 = vxor.u32 %v1822, 2147483648
    %v1824 = vmul.f32 %v1823, 1.442695
    %v1825 = vpow.pop %v1824
    %v1826 = vadd.f32 %v1825, 1.0
    %v1827 = vrcp.pop %v1826
    %v1828 = vmul.f32 1.0, %v1827
    %v1829 = vtanh.pop %v1822
    %v1830 = vmul.f32 %v1828, %v1736
    %1832 = vrot.lane.b32.xlu0 %v1829, 32
    %v1833 = vpop.permute.xlu0 %1832
    %v1835 = vmul.f32 %v1828, %v1833
    %1837 = vrot.lane.b32.xlu0 %v1835, 32
    %v1838 = vpop.permute.xlu0 %1837
    %v1840 = vadd.f32 %v1830, %v1838
    %v1841 = vtanh.pop %v1840
    %1843 = vrot.lane.b32.xlu0 %v1841, 32
    %v1844 = vpop.permute.xlu0 %1843
    %v1846 = vmul.f32 %v1828, %v1844
    %1848 = vrot.lane.b32.xlu0 %v1846, 64
    %v1849 = vpop.permute.xlu0 %1848
    %s1851 = scalar_lea.vmem %s7, 40
    %1852 = vst.msk [vmem:[%s1851] sm:$0xff] %vm68, %v1849
    %v1853 = vld [vmem:[%s845] sm:$0xff]
    %v1854 = vsel %vm68, %v1849, 0
    %1856 = vmatprep.subr.mxu0 0.0
    %1857 = vmatpush1.msra.mxu0 %v1217
    %1858 = vmatprep.subr.mxu0 0.0
    %1859 = vmatpush1.msra.mxu0 %v1218
    %1860 = vmatprep.subr.mxu0 0.0
    %1861 = vmatpush1.msra.mxu0 %v1219
    %1862 = vmatprep.subr.mxu0 0.0
    %1863 = vmatpush1.msra.mxu0 %v1220
    %1864 = vmatprep.subr.mxu0 0.0
    %1865 = vmatpush1.msra.mxu0 0.0
    %1866 = vmatprep.subr.mxu0 0.0
    %1867 = vmatpush1.msra.mxu0 0.0
    %1868 = vmatprep.subr.mxu0 0.0
    %1869 = vmatpush1.msra.mxu0 0.0
    %1870 = vmatprep.subr.mxu0 0.0
    %1871 = vmatpush1.msra.mxu0 0.0
    %1872 = vmatprep.subr.mxu0 0.0
    %1873 = vmatpush1.msra.mxu0 0.0
    %1874 = vmatprep.subr.mxu0 0.0
    %1875 = vmatpush1.msra.mxu0 0.0
    %1876 = vmatprep.subr.mxu0 0.0
    %1877 = vmatpush1.msra.mxu0 0.0
    %1878 = vmatprep.subr.mxu0 0.0
    %1879 = vmatpush1.msra.mxu0 0.0
    %1880 = vmatprep.subr.mxu0 0.0
    %1881 = vmatpush1.msra.mxu0 0.0
    %1882 = vmatprep.subr.mxu0 0.0
    %1883 = vmatpush1.msra.mxu0 0.0
    %1884 = vmatprep.subr.mxu0 0.0
    %1885 = vmatpush1.msra.mxu0 0.0
    %1886 = vmatprep.subr.mxu0 0.0
    %1887 = vmatpush1.msra.mxu0 0.0
    %1888 = vmatprep.subr.mxu0 0.0
    %1889 = vmatpush1.msra.mxu0 0.0
    %1890 = vmatprep.subr.mxu0 0.0
    %1891 = vmatpush1.msra.mxu0 0.0
    %1892 = vmatprep.subr.mxu0 0.0
    %1893 = vmatpush1.msra.mxu0 0.0
    %1894 = vmatprep.subr.mxu0 0.0
    %1895 = vmatpush1.msra.mxu0 0.0
    %1896 = vmatprep.subr.mxu0 0.0
    %1897 = vmatpush1.msra.mxu0 0.0
    %1898 = vmatprep.subr.mxu0 0.0
    %1899 = vmatpush1.msra.mxu0 0.0
    %1900 = vmatprep.subr.mxu0 0.0
    %1901 = vmatpush1.msra.mxu0 0.0
    %1902 = vmatprep.subr.mxu0 0.0
    %1903 = vmatpush1.msra.mxu0 0.0
    %1904 = vmatprep.subr.mxu0 0.0
    %1905 = vmatpush1.msra.mxu0 0.0
    %1906 = vmatprep.subr.mxu0 0.0
    %1907 = vmatpush1.msra.mxu0 0.0
    %1908 = vmatprep.subr.mxu0 0.0
    %1909 = vmatpush1.msra.mxu0 0.0
    %1910 = vmatprep.subr.mxu0 0.0
    %1911 = vmatpush1.msra.mxu0 0.0
    %1912 = vmatprep.subr.mxu0 0.0
    %1913 = vmatpush1.msra.mxu0 0.0
    %1914 = vmatprep.subr.mxu0 0.0
    %1915 = vmatpush1.msra.mxu0 0.0
    %1916 = vmatprep.subr.mxu0 0.0
    %1917 = vmatpush1.msra.mxu0 0.0
    %1918 = vmatprep.subr.mxu0 0.0
    %1919 = vmatpush1.msra.mxu0 0.0
    %1920 = vmatprep.mubr.f32.mxu0 0.0
    %1921 = vmatmul.mubr.f32.gmra.mrb[0].mxu0 %v1854
    %v1922 = vpop.f32.mrb[0].mxu0
    %v1923 = vadd.f32 0.0, %v1922
    %v1924 = vpop.f32.mrb[0].mxu0
    %1925 = vdwg.mxu0
    %v1926 = vadd.f32 %v1853, %v1923
    %v1927 = vxor.u32 %v1926, 2147483648
    %v1928 = vmul.f32 %v1927, 1.442695
    %v1929 = vpow.pop %v1928
    %v1930 = vadd.f32 %v1929, 1.0
    %v1931 = vrcp.pop %v1930
    %v1932 = vmul.f32 1.0, %v1931
    %v1933 = vtanh.pop %v1926
    %v1934 = vmul.f32 %v1932, %v1840
    %1936 = vrot.lane.b32.xlu0 %v1933, 32
    %v1937 = vpop.permute.xlu0 %1936
    %v1939 = vmul.f32 %v1932, %v1937
    %1941 = vrot.lane.b32.xlu0 %v1939, 32
    %v1942 = vpop.permute.xlu0 %1941
    %v1944 = vadd.f32 %v1934, %v1942
    %v1945 = vtanh.pop %v1944
    %1947 = vrot.lane.b32.xlu0 %v1945, 32
    %v1948 = vpop.permute.xlu0 %1947
    %v1950 = vmul.f32 %v1932, %v1948
    %1952 = vrot.lane.b32.xlu0 %v1950, 64
    %v1953 = vpop.permute.xlu0 %1952
    %s1955 = scalar_lea.vmem %s7, 48
    %1956 = vst.msk [vmem:[%s1955] sm:$0xff] %vm68, %v1953
    %v1957 = vld [vmem:[%s950] sm:$0xff]
    %v1958 = vsel %vm68, %v1953, 0
    %1960 = vmatprep.subr.mxu0 0.0
    %1961 = vmatpush1.msra.mxu0 %v1217
    %1962 = vmatprep.subr.mxu0 0.0
    %1963 = vmatpush1.msra.mxu0 %v1218
    %1964 = vmatprep.subr.mxu0 0.0
    %1965 = vmatpush1.msra.mxu0 %v1219
    %1966 = vmatprep.subr.mxu0 0.0
    %1967 = vmatpush1.msra.mxu0 %v1220
    %1968 = vmatprep.subr.mxu0 0.0
    %1969 = vmatpush1.msra.mxu0 0.0
    %1970 = vmatprep.subr.mxu0 0.0
    %1971 = vmatpush1.msra.mxu0 0.0
    %1972 = vmatprep.subr.mxu0 0.0
    %1973 = vmatpush1.msra.mxu0 0.0
    %1974 = vmatprep.subr.mxu0 0.0
    %1975 = vmatpush1.msra.mxu0 0.0
    %1976 = vmatprep.subr.mxu0 0.0
    %1977 = vmatpush1.msra.mxu0 0.0
    %1978 = vmatprep.subr.mxu0 0.0
    %1979 = vmatpush1.msra.mxu0 0.0
    %1980 = vmatprep.subr.mxu0 0.0
    %1981 = vmatpush1.msra.mxu0 0.0
    %1982 = vmatprep.subr.mxu0 0.0
    %1983 = vmatpush1.msra.mxu0 0.0
    %1984 = vmatprep.subr.mxu0 0.0
    %1985 = vmatpush1.msra.mxu0 0.0
    %1986 = vmatprep.subr.mxu0 0.0
    %1987 = vmatpush1.msra.mxu0 0.0
    %1988 = vmatprep.subr.mxu0 0.0
    %1989 = vmatpush1.msra.mxu0 0.0
    %1990 = vmatprep.subr.mxu0 0.0
    %1991 = vmatpush1.msra.mxu0 0.0
    %1992 = vmatprep.subr.mxu0 0.0
    %1993 = vmatpush1.msra.mxu0 0.0
    %1994 = vmatprep.subr.mxu0 0.0
    %1995 = vmatpush1.msra.mxu0 0.0
    %1996 = vmatprep.subr.mxu0 0.0
    %1997 = vmatpush1.msra.mxu0 0.0
    %1998 = vmatprep.subr.mxu0 0.0
    %1999 = vmatpush1.msra.mxu0 0.0
    %2000 = vmatprep.subr.mxu0 0.0
    %2001 = vmatpush1.msra.mxu0 0.0
    %2002 = vmatprep.subr.mxu0 0.0
    %2003 = vmatpush1.msra.mxu0 0.0
    %2004 = vmatprep.subr.mxu0 0.0
    %2005 = vmatpush1.msra.mxu0 0.0
    %2006 = vmatprep.subr.mxu0 0.0
    %2007 = vmatpush1.msra.mxu0 0.0
    %2008 = vmatprep.subr.mxu0 0.0
    %2009 = vmatpush1.msra.mxu0 0.0
    %2010 = vmatprep.subr.mxu0 0.0
    %2011 = vmatpush1.msra.mxu0 0.0
    %2012 = vmatprep.subr.mxu0 0.0
    %2013 = vmatpush1.msra.mxu0 0.0
    %2014 = vmatprep.subr.mxu0 0.0
    %2015 = vmatpush1.msra.mxu0 0.0
    %2016 = vmatprep.subr.mxu0 0.0
    %2017 = vmatpush1.msra.mxu0 0.0
    %2018 = vmatprep.subr.mxu0 0.0
    %2019 = vmatpush1.msra.mxu0 0.0
    %2020 = vmatprep.subr.mxu0 0.0
    %2021 = vmatpush1.msra.mxu0 0.0
    %2022 = vmatprep.subr.mxu0 0.0
    %2023 = vmatpush1.msra.mxu0 0.0
    %2024 = vmatprep.mubr.f32.mxu0 0.0
    %2025 = vmatmul.mubr.f32.gmra.mrb[0].mxu0 %v1958
    %v2026 = vpop.f32.mrb[0].mxu0
    %v2027 = vadd.f32 0.0, %v2026
    %v2028 = vpop.f32.mrb[0].mxu0
    %2029 = vdwg.mxu0
    %v2030 = vadd.f32 %v1957, %v2027
    %v2031 = vxor.u32 %v2030, 2147483648
    %v2032 = vmul.f32 %v2031, 1.442695
    %v2033 = vpow.pop %v2032
    %v2034 = vadd.f32 %v2033, 1.0
    %v2035 = vrcp.pop %v2034
    %v2036 = vmul.f32 1.0, %v2035
    %v2037 = vtanh.pop %v2030
    %v2038 = vmul.f32 %v2036, %v1944
    %2040 = vrot.lane.b32.xlu0 %v2037, 32
    %v2041 = vpop.permute.xlu0 %2040
    %v2043 = vmul.f32 %v2036, %v2041
    %2045 = vrot.lane.b32.xlu0 %v2043, 32
    %v2046 = vpop.permute.xlu0 %2045
    %v2048 = vadd.f32 %v2038, %v2046
    %v2049 = vtanh.pop %v2048
    %2051 = vrot.lane.b32.xlu0 %v2049, 32
    %v2052 = vpop.permute.xlu0 %2051
    %v2054 = vmul.f32 %v2036, %v2052
    %2056 = vrot.lane.b32.xlu0 %v2054, 64
    %v2057 = vpop.permute.xlu0 %2056
    %s2059 = scalar_lea.vmem %s7, 56
    %2060 = vst.msk [vmem:[%s2059] sm:$0xff] %vm68, %v2057
    %2061 = vst.msk [vmem:[%s1221] sm:$0xff] %vm68, %v2057
    %2063 = vrot.lane.b32.xlu0 %v2048, 96
    %v2064 = vpop.permute.xlu0 %2063
    %2066 = vst.msk [vmem:[%s1223] sm:$0xff] %vm68, %v2064
    // Predicated region
    $region38: #{tpu_custom_call.1} parent=1 // pred_check
      _
    $region39: #{tpu_custom_call.1} parent=1 // pred_check_branch
      %2068 = sbr.rel (0) target = $region41
    $region40: #{tpu_custom_call.1} parent=1 // pred_region
      _
    $region41: #{tpu_custom_call.1} parent=1 // pred_fallthru
      _
    // Predicated region
    $region42: #{tpu_custom_call.1} parent=1 // pred_check
      _
    $region43: #{tpu_custom_call.1} parent=1 // pred_check_branch
      %2070 = sbr.rel (0) target = $region45
    $region44: #{tpu_custom_call.1} parent=1 // pred_region
      _
    $region45: #{tpu_custom_call.1} parent=1 // pred_fallthru
      _
    %2071 = vsyncpa [#allocation7], 1

</llo_original>
